<compile_context>
chip_gen: v5e
topology: v5e:2x2
jax: 0.10.0
libtpu: 0.0.40
codegen_flags: <defaults>
</compile_context>

<pallas_src>
import functools
import numpy as np
import jax
import jax.numpy as jnp
from jax import lax
from jax.experimental import pallas as pl
from jax.experimental.pallas import tpu as pltpu

EPSILON = 1e-8
LANE = 128


def _fused_norm_conv_relu_kernel(x_ref, w_ref, b_ref, o_ref, *,
                                 k_h, k_w, stride, out_h, out_w, batch_block):
    """x_ref: (B, s*s, Hs, Ws, C)   phase grids of the RAW input, B batch elements.
       w_ref: (KH*KW*C, Cout_pad)   im2col-ordered weights (Cout zero-padded to 128).
       b_ref: (1, Cout_pad)         zero-padded bias.
       o_ref: (B, OH, OW, Cout_pad) lane-dense output block."""
    s = stride
    cout_pad = o_ref.shape[-1]
    k_dim = w_ref.shape[0]                        # KH*KW*C

    lhs_blocks = []
    for b in range(batch_block):                  # static unroll, B is small
        # ---- channel-wise L2 normalization on narrow (C-lane) data -----------
        # Lives only in vregs/VMEM -> no HBM round-trip of the normalized tensor.
        xn = []
        for p in range(s * s):
            xp = x_ref[b, p]                                    # (Hs, Ws, C)
            ssq = jnp.sum(xp * xp, axis=-1, keepdims=True)      # (Hs, Ws, 1)
            # exact 1/(eps + ||x||) semantics (NOT rsqrt(ss+eps)); reciprocal of
            # the (Hs,Ws,1) column, then a single multiply over the C lanes.
            inv = 1.0 / (EPSILON + jnp.sqrt(ssq))
            xn.append(xp * inv)

        # ---- in-VMEM im2col: per-tap unit-stride windows, concatenated -------
        pieces = []
        for kh in range(k_h):
            for kw in range(k_w):
                p = (kh % s) * s + (kw % s)       # which phase grid this tap reads
                q, r = kh // s, kw // s           # unit-stride window offset in it
                pieces.append(xn[p][q:q + out_h, r:r + out_w, :])   # (OH, OW, C)
        patch = jnp.concatenate(pieces, axis=-1)                    # (OH, OW, KH*KW*C)
        lhs_blocks.append(patch.reshape(out_h * out_w, k_dim))

    lhs = lhs_blocks[0] if batch_block == 1 else jnp.concatenate(lhs_blocks, axis=0)

    # ---- ONE MXU matmul: M = B*OH*OW, K = KH*KW*C, N = 128 --------------------
    out = jnp.dot(lhs, w_ref[...], preferred_element_type=jnp.float32)
    out = jnp.maximum(out + b_ref[...], 0.0)      # bias + ReLU, lane-dense
    # single wide-data reshape, once, at the store
    o_ref[...] = out.reshape(batch_block, out_h, out_w, cout_pad)


def _pick_batch_block(n, rows_per_elem):
    """Rows of the matmul LHS per grid step = B * rows_per_elem.  Prefer B that
    (a) keeps >= 2 grid steps when N allows it (v7x megacore + DMA pipelining) and
    (b) reaches >= 256 LHS rows (fills the 256-row MXU on v6e/v7x) when possible."""
    divisors = [d for d in range(1, n + 1) if n % d == 0]
    pipelined = [d for d in divisors if n // d >= 2]
    pool = pipelined if pipelined else divisors
    for d in sorted(pool):
        if d * rows_per_elem >= 256:
            return d
    return max(pool)


class ReceptiveFieldLayerPallas:
    """JAX/Pallas port of forwardforward ReceptiveFieldLayer (forward only)."""

    def __init__(self, C_in, C_out, kernel_size, stride, key):
        self.C_in, self.C_out = C_in, C_out
        self.kernel_size, self.stride = kernel_size, stride
        # Deterministic init mirroring PyTorch Conv2d defaults:
        # uniform(-1/sqrt(fan_in), 1/sqrt(fan_in)) for both weight and bias.
        fan_in = C_in * kernel_size * kernel_size
        bound = 1.0 / np.sqrt(fan_in)
        kw_key, kb_key = jax.random.split(key)
        # PyTorch Conv2d weight layout: (C_out, C_in, KH, KW)
        self.weight = jax.random.uniform(
            kw_key, (C_out, C_in, kernel_size, kernel_size),
            minval=-bound, maxval=bound, dtype=jnp.float32)
        self.bias = jax.random.uniform(
            kb_key, (C_out,), minval=-bound, maxval=bound, dtype=jnp.float32)
        # TODO(synk): train() (Adam + sigmoid goodness loss) is training-only and
        # not part of the forward kernel.

    def forward(self, x_nchw):
        N, C, H, W = x_nchw.shape
        KH = KW = self.kernel_size
        s = self.stride
        OH = (H - KH) // s + 1
        OW = (W - KW) // s + 1
        cout_pad = max(LANE, ((self.C_out + LANE - 1) // LANE) * LANE)

        # ---- glue: phase decomposition (1x data movement, NOT an im2col) ------
        x_nhwc = jnp.transpose(x_nchw, (0, 2, 3, 1))                 # NCHW -> NHWC
        Hp = ((H + s - 1) // s) * s
        Wp = ((W + s - 1) // s) * s
        if (Hp, Wp) != (H, W):                                       # padded rows/cols
            x_nhwc = jnp.pad(x_nhwc,                                 # are never read
                             ((0, 0), (0, Hp - H), (0, Wp - W), (0, 0)))  # by valid taps
        Hs, Ws = Hp // s, Wp // s
        # phases[n, j*s+l, i, k, c] = x[n, i*s + j, k*s + l, c]
        phases = x_nhwc.reshape(N, Hs, s, Ws, s, C).transpose(0, 2, 4, 1, 3, 5)
        phases = phases.reshape(N, s * s, Hs, Ws, C)

        # im2col-ordered weights: (C_out,C_in,KH,KW) -> (KH*KW*C_in, Cout_pad);
        # row order (kh, kw, c) matches the kernel's patch concatenation order.
        # Zero-padded output channels give relu(0+0)=0 and are sliced off below.
        w_flat = jnp.transpose(self.weight, (2, 3, 1, 0)).reshape(
            KH * KW * C, self.C_out)
        w_flat = jnp.pad(w_flat, ((0, 0), (0, cout_pad - self.C_out)))
        b_pad = jnp.pad(self.bias, (0, cout_pad - self.C_out)).reshape(1, cout_pad)

        B = _pick_batch_block(N, OH * OW)
        grid = (N // B,)

        kernel = functools.partial(
            _fused_norm_conv_relu_kernel, k_h=KH, k_w=KW, stride=s,
            out_h=OH, out_w=OW, batch_block=B)

        flops = (2 * N * OH * OW * KH * KW * C * cout_pad      # the single matmul
                 + 6 * N * s * s * Hs * Ws * C)                # normalization
        bytes_accessed = 4 * (phases.size + w_flat.size + b_pad.size
                              + N * OH * OW * cout_pad)

        out = pl.pallas_call(
            kernel,
            out_shape=jax.ShapeDtypeStruct((N, OH, OW, cout_pad), jnp.float32),
            grid=grid,
            in_specs=[
                pl.BlockSpec((B, s * s, Hs, Ws, C), lambda n: (n, 0, 0, 0, 0)),
                pl.BlockSpec((KH * KW * C, cout_pad), lambda n: (0, 0)),
                pl.BlockSpec((1, cout_pad), lambda n: (0, 0)),
            ],
            out_specs=pl.BlockSpec((B, OH, OW, cout_pad), lambda n: (n, 0, 0, 0)),
            compiler_params=pltpu.CompilerParams(
                dimension_semantics=("parallel",)),
            cost_estimate=pl.CostEstimate(
                flops=flops, transcendentals=2 * N * s * s * Hs * Ws,
                bytes_accessed=bytes_accessed),
        )(phases, w_flat, b_pad)

        out = out[:, :, :, :self.C_out]                          # drop lane padding
        return jnp.transpose(out, (0, 3, 1, 2))                  # NHWC -> NCHW


if __name__ == "__main__":
    key = jax.random.PRNGKey(0)
    k_x, k_params = jax.random.split(key)

    N, C_in, H, W = 2, 4, 16, 16
    C_out, kernel_size, stride = 8, 3, 2

    x = jax.random.normal(k_x, (N, C_in, H, W), dtype=jnp.float32)

    layer = ReceptiveFieldLayerPallas(C_in, C_out, kernel_size, stride, k_params)
    out = jax.block_until_ready(layer.forward(x))

    # Pure-JAX reference (same semantics as the PyTorch module forward).
    norm = jnp.sqrt(jnp.sum(x * x, axis=1, keepdims=True))
    x_norm = x / (EPSILON + norm)
    ref = lax.conv_general_dilated(
        x_norm, layer.weight, window_strides=(stride, stride), padding="VALID",
        dimension_numbers=("NCHW", "OIHW", "NCHW"))
    ref = jnp.maximum(ref + layer.bias[None, :, None, None], 0.0)

    np.testing.assert_allclose(np.asarray(out), np.asarray(ref),
                               rtol=1e-5, atol=1e-5)
    assert out.shape == (N, C_out, (H - kernel_size) // stride + 1,
                         (W - kernel_size) // stride + 1)
    print("KERNEL_OK")
</pallas_src>

<mosaic_0001>
module attributes {stable_mosaic.version = 11 : i64} {
  func.func @_fused_norm_conv_relu_kernel(%arg0: i32, %arg1: memref<1x4x8x8x4xf32, #tpu.memory_space<vmem>>, %arg2: memref<36x128xf32, #tpu.memory_space<vmem>>, %arg3: memref<1x128xf32, #tpu.memory_space<vmem>>, %arg4: memref<1x7x7x128xf32, #tpu.memory_space<vmem>>) attributes {dimension_semantics = [#tpu.dimension_semantics<parallel>], iteration_bounds = array<i64: 2>, scalar_prefetch = 0 : i64, scratch_operands = 0 : i64, tpu.core_type = #tpu.core_type<tc>, window_params = [{transform_indices = @transform_0, window_bounds = array<i64: 1, 4, 8, 8, 4>}, {pipeline_mode = #tpu.pipeline_mode<synchronous>, transform_indices = @transform_1, window_bounds = array<i64: 36, 128>}, {pipeline_mode = #tpu.pipeline_mode<synchronous>, transform_indices = @transform_2, window_bounds = array<i64: 1, 128>}, {transform_indices = @transform_3, window_bounds = array<i64: 1, 7, 7, 128>}]} {
    %c0 = arith.constant 0 : index
    %c0_0 = arith.constant 0 : index
    %c0_1 = arith.constant 0 : index
    %c0_2 = arith.constant 0 : index
    %c0_3 = arith.constant 0 : index
    %0 = vector.load %arg1[%c0, %c0_0, %c0_1, %c0_2, %c0_3] : memref<1x4x8x8x4xf32, #tpu.memory_space<vmem>>, vector<1x1x8x8x4xf32>
    %1 = vector.shape_cast %0 : vector<1x1x8x8x4xf32> to vector<8x8x4xf32>
    %2 = arith.mulf %1, %1 : vector<8x8x4xf32>
    %cst = arith.constant dense<0.000000e+00> : vector<8x8xf32>
    %3 = vector.multi_reduction <add>, %2, %cst [2] : vector<8x8x4xf32> to vector<8x8xf32>
    %4 = vector.shape_cast %3 : vector<8x8xf32> to vector<8x8x1xf32>
    %5 = math.sqrt %4 : vector<8x8x1xf32>
    %cst_4 = arith.constant 9.99999993E-9 : f32
    %6 = vector.broadcast %cst_4 : f32 to vector<8x8x1xf32>
    %7 = arith.addf %6, %5 : vector<8x8x1xf32>
    %cst_5 = arith.constant 1.000000e+00 : f32
    %8 = vector.broadcast %cst_5 : f32 to vector<8x8x1xf32>
    %9 = arith.divf %8, %7 : vector<8x8x1xf32>
    %10 = vector.broadcast %9 : vector<8x8x1xf32> to vector<8x8x4xf32>
    %11 = arith.mulf %1, %10 : vector<8x8x4xf32>
    %c0_6 = arith.constant 0 : index
    %c1 = arith.constant 1 : index
    %c0_7 = arith.constant 0 : index
    %c0_8 = arith.constant 0 : index
    %c0_9 = arith.constant 0 : index
    %12 = vector.load %arg1[%c0_6, %c1, %c0_7, %c0_8, %c0_9] : memref<1x4x8x8x4xf32, #tpu.memory_space<vmem>>, vector<1x1x8x8x4xf32>
    %13 = vector.shape_cast %12 : vector<1x1x8x8x4xf32> to vector<8x8x4xf32>
    %14 = arith.mulf %13, %13 : vector<8x8x4xf32>
    %cst_10 = arith.constant dense<0.000000e+00> : vector<8x8xf32>
    %15 = vector.multi_reduction <add>, %14, %cst_10 [2] : vector<8x8x4xf32> to vector<8x8xf32>
    %16 = vector.shape_cast %15 : vector<8x8xf32> to vector<8x8x1xf32>
    %17 = math.sqrt %16 : vector<8x8x1xf32>
    %cst_11 = arith.constant 9.99999993E-9 : f32
    %18 = vector.broadcast %cst_11 : f32 to vector<8x8x1xf32>
    %19 = arith.addf %18, %17 : vector<8x8x1xf32>
    %cst_12 = arith.constant 1.000000e+00 : f32
    %20 = vector.broadcast %cst_12 : f32 to vector<8x8x1xf32>
    %21 = arith.divf %20, %19 : vector<8x8x1xf32>
    %22 = vector.broadcast %21 : vector<8x8x1xf32> to vector<8x8x4xf32>
    %23 = arith.mulf %13, %22 : vector<8x8x4xf32>
    %c0_13 = arith.constant 0 : index
    %c2 = arith.constant 2 : index
    %c0_14 = arith.constant 0 : index
    %c0_15 = arith.constant 0 : index
    %c0_16 = arith.constant 0 : index
    %24 = vector.load %arg1[%c0_13, %c2, %c0_14, %c0_15, %c0_16] : memref<1x4x8x8x4xf32, #tpu.memory_space<vmem>>, vector<1x1x8x8x4xf32>
    %25 = vector.shape_cast %24 : vector<1x1x8x8x4xf32> to vector<8x8x4xf32>
    %26 = arith.mulf %25, %25 : vector<8x8x4xf32>
    %cst_17 = arith.constant dense<0.000000e+00> : vector<8x8xf32>
    %27 = vector.multi_reduction <add>, %26, %cst_17 [2] : vector<8x8x4xf32> to vector<8x8xf32>
    %28 = vector.shape_cast %27 : vector<8x8xf32> to vector<8x8x1xf32>
    %29 = math.sqrt %28 : vector<8x8x1xf32>
    %cst_18 = arith.constant 9.99999993E-9 : f32
    %30 = vector.broadcast %cst_18 : f32 to vector<8x8x1xf32>
    %31 = arith.addf %30, %29 : vector<8x8x1xf32>
    %cst_19 = arith.constant 1.000000e+00 : f32
    %32 = vector.broadcast %cst_19 : f32 to vector<8x8x1xf32>
    %33 = arith.divf %32, %31 : vector<8x8x1xf32>
    %34 = vector.broadcast %33 : vector<8x8x1xf32> to vector<8x8x4xf32>
    %35 = arith.mulf %25, %34 : vector<8x8x4xf32>
    %c0_20 = arith.constant 0 : index
    %c3 = arith.constant 3 : index
    %c0_21 = arith.constant 0 : index
    %c0_22 = arith.constant 0 : index
    %c0_23 = arith.constant 0 : index
    %36 = vector.load %arg1[%c0_20, %c3, %c0_21, %c0_22, %c0_23] : memref<1x4x8x8x4xf32, #tpu.memory_space<vmem>>, vector<1x1x8x8x4xf32>
    %37 = vector.shape_cast %36 : vector<1x1x8x8x4xf32> to vector<8x8x4xf32>
    %38 = arith.mulf %37, %37 : vector<8x8x4xf32>
    %cst_24 = arith.constant dense<0.000000e+00> : vector<8x8xf32>
    %39 = vector.multi_reduction <add>, %38, %cst_24 [2] : vector<8x8x4xf32> to vector<8x8xf32>
    %40 = vector.shape_cast %39 : vector<8x8xf32> to vector<8x8x1xf32>
    %41 = math.sqrt %40 : vector<8x8x1xf32>
    %cst_25 = arith.constant 9.99999993E-9 : f32
    %42 = vector.broadcast %cst_25 : f32 to vector<8x8x1xf32>
    %43 = arith.addf %42, %41 : vector<8x8x1xf32>
    %cst_26 = arith.constant 1.000000e+00 : f32
    %44 = vector.broadcast %cst_26 : f32 to vector<8x8x1xf32>
    %45 = arith.divf %44, %43 : vector<8x8x1xf32>
    %46 = vector.broadcast %45 : vector<8x8x1xf32> to vector<8x8x4xf32>
    %47 = arith.mulf %37, %46 : vector<8x8x4xf32>
    %48 = vector.extract_strided_slice %11 {offsets = [0, 0, 0], sizes = [7, 7, 4], strides = [1, 1, 1]} : vector<8x8x4xf32> to vector<7x7x4xf32>
    %49 = vector.extract_strided_slice %23 {offsets = [0, 0, 0], sizes = [7, 7, 4], strides = [1, 1, 1]} : vector<8x8x4xf32> to vector<7x7x4xf32>
    %50 = vector.extract_strided_slice %11 {offsets = [0, 1, 0], sizes = [7, 7, 4], strides = [1, 1, 1]} : vector<8x8x4xf32> to vector<7x7x4xf32>
    %51 = vector.extract_strided_slice %35 {offsets = [0, 0, 0], sizes = [7, 7, 4], strides = [1, 1, 1]} : vector<8x8x4xf32> to vector<7x7x4xf32>
    %52 = vector.extract_strided_slice %47 {offsets = [0, 0, 0], sizes = [7, 7, 4], strides = [1, 1, 1]} : vector<8x8x4xf32> to vector<7x7x4xf32>
    %53 = vector.extract_strided_slice %35 {offsets = [0, 1, 0], sizes = [7, 7, 4], strides = [1, 1, 1]} : vector<8x8x4xf32> to vector<7x7x4xf32>
    %54 = vector.extract_strided_slice %11 {offsets = [1, 0, 0], sizes = [7, 7, 4], strides = [1, 1, 1]} : vector<8x8x4xf32> to vector<7x7x4xf32>
    %55 = vector.extract_strided_slice %23 {offsets = [1, 0, 0], sizes = [7, 7, 4], strides = [1, 1, 1]} : vector<8x8x4xf32> to vector<7x7x4xf32>
    %56 = vector.extract_strided_slice %11 {offsets = [1, 1, 0], sizes = [7, 7, 4], strides = [1, 1, 1]} : vector<8x8x4xf32> to vector<7x7x4xf32>
    %57 = tpu.concatenate %48, %49, %50, %51, %52, %53, %54, %55, %56 in 2 : vector<7x7x4xf32>, vector<7x7x4xf32>, vector<7x7x4xf32>, vector<7x7x4xf32>, vector<7x7x4xf32>, vector<7x7x4xf32>, vector<7x7x4xf32>, vector<7x7x4xf32>, vector<7x7x4xf32> -> vector<7x7x36xf32>
    %58 = vector.shape_cast %57 : vector<7x7x36xf32> to vector<49x36xf32>
    %c0_27 = arith.constant 0 : index
    %c0_28 = arith.constant 0 : index
    %59 = vector.load %arg2[%c0_27, %c0_28] : memref<36x128xf32, #tpu.memory_space<vmem>>, vector<36x128xf32>
    %cst_29 = arith.constant dense<0.000000e+00> : vector<49x128xf32>
    %60 = tpu.matmul %58, %59, %cst_29 {dimension_numbers = #tpu.dot_dimension_numbers<[1], [0], [0], [1], [0, 0, 1, 1], [], []>} : vector<49x36xf32>, vector<36x128xf32>, vector<49x128xf32> -> vector<49x128xf32>
    %c0_30 = arith.constant 0 : index
    %c0_31 = arith.constant 0 : index
    %61 = vector.load %arg3[%c0_30, %c0_31] : memref<1x128xf32, #tpu.memory_space<vmem>>, vector<1x128xf32>
    %62 = vector.broadcast %61 : vector<1x128xf32> to vector<49x128xf32>
    %63 = arith.addf %60, %62 : vector<49x128xf32>
    %cst_32 = arith.constant 0.000000e+00 : f32
    %64 = vector.broadcast %cst_32 : f32 to vector<49x128xf32>
    %65 = arith.maximumf %63, %64 : vector<49x128xf32>
    %66 = vector.shape_cast %65 : vector<49x128xf32> to vector<1x7x7x128xf32>
    %c0_33 = arith.constant 0 : index
    %c0_34 = arith.constant 0 : index
    %c0_35 = arith.constant 0 : index
    %c0_36 = arith.constant 0 : index
    %67 = vector.load %arg4[%c0_33, %c0_34, %c0_35, %c0_36] : memref<1x7x7x128xf32, #tpu.memory_space<vmem>>, vector<1x7x7x128xf32>
    tpu.vector_store %arg4[%c0_33, %c0_34, %c0_35, %c0_36], %66 {strides = array<i32>} : memref<1x7x7x128xf32, #tpu.memory_space<vmem>>, vector<1x7x7x128xf32>,
    return
  }
  func.func @transform_0(%arg0: i32) -> (i32, i32, i32, i32, i32) {
    %c0_i32 = arith.constant 0 : i32
    %c0_i32_0 = arith.constant 0 : i32
    %c0_i32_1 = arith.constant 0 : i32
    %c0_i32_2 = arith.constant 0 : i32
    %c0_i32_3 = arith.constant 0 : i32
    return %arg0, %c0_i32, %c0_i32_0, %c0_i32_1, %c0_i32_2 : i32, i32, i32, i32, i32
  }
  func.func @transform_1(%arg0: i32) -> (i32, i32) {
    %c0_i32 = arith.constant 0 : i32
    %c0_i32_0 = arith.constant 0 : i32
    %c0_i32_1 = arith.constant 0 : i32
    return %c0_i32, %c0_i32_0 : i32, i32
  }
  func.func @transform_2(%arg0: i32) -> (i32, i32) {
    %c0_i32 = arith.constant 0 : i32
    %c0_i32_0 = arith.constant 0 : i32
    %c0_i32_1 = arith.constant 0 : i32
    return %c0_i32, %c0_i32_0 : i32, i32
  }
  func.func @transform_3(%arg0: i32) -> (i32, i32, i32, i32) {
    %c0_i32 = arith.constant 0 : i32
    %c0_i32_0 = arith.constant 0 : i32
    %c0_i32_1 = arith.constant 0 : i32
    %c0_i32_2 = arith.constant 0 : i32
    return %arg0, %c0_i32, %c0_i32_0, %c0_i32_1 : i32, i32, i32, i32
  }
}

</mosaic_0001>

<llo_original>
// kernel: tpu_custom_call.1
$region0: #{tpu_custom_call.1}
  #allocation0 [shape = 'u32[]', space=smem, size = 0x4, offset = 0x4, fixed_abs, tag = 'smem constant byte address 0x4 - core index']
  #allocation1 [shape = 'u32[72,128]{1,0:T(1,128)}', space=vmem, size = 0x9000, scoped, tag = 'internal scratch']
  %s0 = inlined_call_operand.vmem [shape: f32[2,4,8,8,4], index: 0, kind: input, shape index: {}]
  %s1 = inlined_call_operand.vmem [shape: f32[36,128], index: 1, kind: input, shape index: {}]
  %s2 = inlined_call_operand.vmem [shape: f32[1,128], index: 2, kind: input, shape index: {}]
  %s3 = inlined_call_operand.vmem [shape: f32[2,7,7,128], index: 3, kind: output, shape index: {}]
  %s4 = sld [smem:[#allocation0]]
  $region45: #{tpu_custom_call.1} parent=0
    _
  %s6 = ssub.s32 1, %s4
  %s7 = scalar_select 0, %s6, %s4
  loop: start=0, step=1, limit=4
  $region2: #{tpu_custom_call.1} parent=0 // loop_pre_header
    _
  $region3: #{tpu_custom_call.1} parent=0 // loop_header
    %s9 = sphi 0, %s13
    %p10 = scmp.ge.s32.totalorder %s9, 4
    %s19 = sphi 0, %s21
    %s22 = sphi 0, %s19
    %s23 = sphi 0, %s22
    %s39 = sphi 0, %s23
    %s43 = sphi 0, %s43
    %s45 = sphi 0, %s43
    %s46 = sphi 0, %s45
    %s60 = sphi 0, %s46
    %s64 = sphi 0, %s64
    %s66 = sphi 0, %s64
    %s67 = sphi 0, %s66
    %s81 = sphi 0, %s67
    %s87 = sphi 0, %s89
    %s90 = sphi 0, %s87
    %s91 = sphi 0, %s90
    %s107 = sphi 0, %s91
  $region4: #{tpu_custom_call.1} parent=0 // loop_header_branch
    %12 = sbr.rel (%p10) target = $region8
  $region5: #{tpu_custom_call.1} parent=0 // loop_body
    %s14 = ssub.s32 %s9, 1
    %s15 = ssub.s32 %s9, 2
    %s16 = sadd.s32 %s9, 1
    %s17 = ssub.s32 %s9, %s16
    %p18 = scmp.eq.s32.totalorder %s17, 0
    %s20 = sadd.s32 %s19, 1
    %s21 = scalar_select %p18, %s19, %s20
    %p24 = pneg %p18
    %p25 = scmp.eq.s32.totalorder %s9, 1
    %p26 = por %p24, %p25
    %p27 = scmp.ne.s32.totalorder %s19, %s22
    %p28 = scmp.eq.s32.totalorder %s9, 0
    %p29 = por %p27, %p28
    %p30 = scmp.ne.s32.totalorder %s19, %s22
    %p31 = scmp.eq.s32.totalorder %s14, 1
    %p32 = por %p30, %p31
    %p33 = scmp.ne.s32.totalorder %s22, %s23
    %p34 = scmp.eq.s32.totalorder %s14, 0
    %p35 = por %p33, %p34
    %p36 = scmp.ne.s32.totalorder %s22, %s23
    %p37 = scmp.eq.s32.totalorder %s15, 1
    %p38 = por %p36, %p37
    %p40 = scmp.ne.s32.totalorder %s23, %s39
    %p41 = scmp.eq.s32.totalorder %s15, 0
    %p42 = por %p40, %p41
    %s44 = sadd.s32 %s43, 1
    %p47 = scmp.eq.s32.totalorder %s9, 1
    %p48 = scmp.ne.s32.totalorder %s43, %s45
    %p49 = scmp.eq.s32.totalorder %s9, 0
    %p50 = por %p48, %p49
    %p51 = scmp.ne.s32.totalorder %s43, %s45
    %p52 = scmp.eq.s32.totalorder %s14, 1
    %p53 = por %p51, %p52
    %p54 = scmp.ne.s32.totalorder %s45, %s46
    %p55 = scmp.eq.s32.totalorder %s14, 0
    %p56 = por %p54, %p55
    %p57 = scmp.ne.s32.totalorder %s45, %s46
    %p58 = scmp.eq.s32.totalorder %s15, 1
    %p59 = por %p57, %p58
    %p61 = scmp.ne.s32.totalorder %s46, %s60
    %p62 = scmp.eq.s32.totalorder %s15, 0
    %p63 = por %p61, %p62
    %s65 = sadd.s32 %s64, 1
    %p68 = scmp.eq.s32.totalorder %s9, 1
    %p69 = scmp.ne.s32.totalorder %s64, %s66
    %p70 = scmp.eq.s32.totalorder %s9, 0
    %p71 = por %p69, %p70
    %p72 = scmp.ne.s32.totalorder %s64, %s66
    %p73 = scmp.eq.s32.totalorder %s14, 1
    %p74 = por %p72, %p73
    %p75 = scmp.ne.s32.totalorder %s66, %s67
    %p76 = scmp.eq.s32.totalorder %s14, 0
    %p77 = por %p75, %p76
    %p78 = scmp.ne.s32.totalorder %s66, %s67
    %p79 = scmp.eq.s32.totalorder %s15, 1
    %p80 = por %p78, %p79
    %p82 = scmp.ne.s32.totalorder %s67, %s81
    %p83 = scmp.eq.s32.totalorder %s15, 0
    %p84 = por %p82, %p83
    %s85 = ssub.s32 %s9, %s16
    %p86 = scmp.eq.s32.totalorder %s85, 0
    %s88 = sadd.s32 %s87, 1
    %s89 = scalar_select %p86, %s87, %s88
    %p92 = pneg %p86
    %p93 = scmp.eq.s32.totalorder %s9, 1
    %p94 = por %p92, %p93
    %p95 = scmp.ne.s32.totalorder %s87, %s90
    %p96 = scmp.eq.s32.totalorder %s9, 0
    %p97 = por %p95, %p96
    %p98 = scmp.ne.s32.totalorder %s87, %s90
    %p99 = scmp.eq.s32.totalorder %s14, 1
    %p100 = por %p98, %p99
    %p101 = scmp.ne.s32.totalorder %s90, %s91
    %p102 = scmp.eq.s32.totalorder %s14, 0
    %p103 = por %p101, %p102
    %p104 = scmp.ne.s32.totalorder %s90, %s91
    %p105 = scmp.eq.s32.totalorder %s15, 1
    %p106 = por %p104, %p105
    %p108 = scmp.ne.s32.totalorder %s91, %s107
    %p109 = scmp.eq.s32.totalorder %s15, 0
    %p110 = por %p108, %p109
    %p111 = scmp.le.s32.totalorder 1, %s9
    %p112 = scmp.lt.s32.totalorder %s9, 3
    %p113 = pnand %p111, %p112
    %p114 = pneg %p113
    // Predicated region
    $region9: #{tpu_custom_call.1} parent=5 // pred_check
      _
    $region10: #{tpu_custom_call.1} parent=5 // pred_check_branch
      %116 = sbr.rel (%p113) target = $region12
    $region11: #{tpu_custom_call.1} parent=5 // pred_region
      %s117 = ssub.s32 %s9, 1
      // Predicated region
      $region13: #{tpu_custom_call.1} parent=11 // pred_check
        %p118 = pneg %p56
      $region14: #{tpu_custom_call.1} parent=11 // pred_check_branch
        %120 = sbr.rel (%p118) target = $region16
      $region15: #{tpu_custom_call.1} parent=11 // pred_region
        _
      $region16: #{tpu_custom_call.1} parent=11 // pred_fallthru
        _
      // Predicated region
      $region17: #{tpu_custom_call.1} parent=11 // pred_check
        %p121 = pneg %p77
      $region18: #{tpu_custom_call.1} parent=11 // pred_check_branch
        %123 = sbr.rel (%p121) target = $region20
      $region19: #{tpu_custom_call.1} parent=11 // pred_region
        _
      $region20: #{tpu_custom_call.1} parent=11 // pred_fallthru
        _
    $region12: #{tpu_custom_call.1} parent=5 // pred_fallthru
      _
    %p124 = scmp.lt.s32.totalorder %s9, 2
    // Predicated region
    $region21: #{tpu_custom_call.1} parent=5 // pred_check
      %p125 = pneg %p124
    $region22: #{tpu_custom_call.1} parent=5 // pred_check_branch
      %127 = sbr.rel (%p125) target = $region24
    $region23: #{tpu_custom_call.1} parent=5 // pred_region
      // Predicated region
      $region25: #{tpu_custom_call.1} parent=23 // pred_check
        %p128 = pneg %p29
      $region26: #{tpu_custom_call.1} parent=23 // pred_check_branch
        %130 = sbr.rel (%p128) target = $region28
      $region27: #{tpu_custom_call.1} parent=23 // pred_region
        %p131 = scmp.lt.s32.totalorder %s9, 1
        %s132 = scalar_select %p131, %s9, 1
        %s133 = smul.addr %s132, 32
        %s134 = smul.addr %s133, 8
        %s135 = scalar_lea.vmem %s0, %s134
      $region28: #{tpu_custom_call.1} parent=23 // pred_fallthru
        _
    $region24: #{tpu_custom_call.1} parent=5 // pred_fallthru
      _
    %p136 = scmp.le.s32.totalorder 1, %s9
    %p137 = scmp.lt.s32.totalorder %s9, 3
    %p138 = pnand %p136, %p137
    %p139 = pneg %p138
    // Predicated region
    $region29: #{tpu_custom_call.1} parent=5 // pred_check
      _
    $region30: #{tpu_custom_call.1} parent=5 // pred_check_branch
      %141 = sbr.rel (%p138) target = $region32
    $region31: #{tpu_custom_call.1} parent=5 // pred_region
      %s142 = ssub.s32 %s9, 1
      %p143 = scmp.lt.s32.totalorder %s14, 1
      %s144 = scalar_select %p143, %s14, 1
      %s145 = smul.addr %s144, 32
      %s146 = smul.addr %s145, 8
      %s147 = scalar_lea.vmem %s0, %s146
      %p148 = pneg %p35
      %p149 = pneg %p32
      %p150 = pneg %p56
      %p151 = pneg %p53
      %p152 = pneg %p77
      %p153 = pneg %p74
      %p154 = pneg %p103
      %p155 = pneg %p100
      %p156 = scmp.lt.s32.totalorder %s14, 1
      %s157 = scalar_select %p156, %s14, 1
      %s158 = smul.addr %s157, 7
      %s159 = smul.addr %s158, 8
      %s160 = scalar_lea.vmem %s3, %s159
      %p161 = scmp.lt.s32.totalorder %s14, 1
      %s162 = scalar_select %p161, %s14, 1
      %s163 = smul.addr %s162, 32
      %s164 = smul.addr %s163, 8
      %s165 = scalar_lea.vmem %s0, %s164
      %p166 = scmp.lt.s32.totalorder %s14, 1
      %s167 = scalar_select %p166, %s14, 1
      %s168 = smul.addr %s167, 7
      %s169 = smul.addr %s168, 8
      %s170 = scalar_lea.vmem %s3, %s169
      %v171 = vld [vmem:[%s165] sm:$0xff]
      %v172 = vld [vmem:[%s165 + $0x8] sm:$0xff]
      %v173 = vld [vmem:[%s165 + $0x10] sm:$0xff]
      %v174 = vld [vmem:[%s165 + $0x18] sm:$0xff]
      %v175 = vld [vmem:[%s165 + $0x20] sm:$0xff]
      %v176 = vld [vmem:[%s165 + $0x28] sm:$0xff]
      %v177 = vld [vmem:[%s165 + $0x30] sm:$0xff]
      %v178 = vld [vmem:[%s165 + $0x38] sm:$0xff]
      %v179 = vmul.f32 %v171, %v171
      %v180 = vmul.f32 %v172, %v172
      %v181 = vmul.f32 %v173, %v173
      %v182 = vmul.f32 %v174, %v174
      %v183 = vmul.f32 %v175, %v175
      %v184 = vmul.f32 %v176, %v176
      %v185 = vmul.f32 %v177, %v177
      %v186 = vmul.f32 %v178, %v178
      %vm187 = vcmask 31744
      %v188 = vsel %vm187, %v179, 0.0
      %189 = vadd.xlane.f32.xlu0 %v188
      %v190 = vpop.xlane.xlu0 %189
      %v191 = vsel %vm187, %v180, 0.0
      %192 = vadd.xlane.f32.xlu0 %v191
      %v193 = vpop.xlane.xlu0 %192
      %v194 = vsel %vm187, %v181, 0.0
      %195 = vadd.xlane.f32.xlu0 %v194
      %v196 = vpop.xlane.xlu0 %195
      %v197 = vsel %vm187, %v182, 0.0
      %198 = vadd.xlane.f32.xlu0 %v197
      %v199 = vpop.xlane.xlu0 %198
      %v200 = vsel %vm187, %v183, 0.0
      %201 = vadd.xlane.f32.xlu0 %v200
      %v202 = vpop.xlane.xlu0 %201
      %v203 = vsel %vm187, %v184, 0.0
      %204 = vadd.xlane.f32.xlu0 %v203
      %v205 = vpop.xlane.xlu0 %204
      %v206 = vsel %vm187, %v185, 0.0
      %207 = vadd.xlane.f32.xlu0 %v206
      %v208 = vpop.xlane.xlu0 %207
      %v209 = vsel %vm187, %v186, 0.0
      %210 = vadd.xlane.f32.xlu0 %v209
      %v211 = vpop.xlane.xlu0 %210
      %v212 = vrsqrt.pop %v190
      %v213 = vmul.f32 %v212, %v190
      %v214 = vmul.f32 %v213, %v212
      %v215 = vmul.f32 0.5, %v214
      %v216 = vsub.f32 1.5, %v215
      %v217 = vmul.f32 %v212, %v216
      %v218 = vmul.f32 %v190, %v217
      %vm219 = vcmp.eq.f32.partialorder %v190, inf
      %v220 = vsel %vm219, %v190, %v218
      %vm221 = vcmp.eq.f32.partialorder %v190, 0.0
      %v222 = vand.u32 %v190, 2147483648
      %v223 = vsel %vm221, %v222, %v220
      %v224 = vrsqrt.pop %v193
      %v225 = vmul.f32 %v224, %v193
      %v226 = vmul.f32 %v225, %v224
      %v227 = vmul.f32 0.5, %v226
      %v228 = vsub.f32 1.5, %v227
      %v229 = vmul.f32 %v224, %v228
      %v230 = vmul.f32 %v193, %v229
      %vm231 = vcmp.eq.f32.partialorder %v193, inf
      %v232 = vsel %vm231, %v193, %v230
      %vm233 = vcmp.eq.f32.partialorder %v193, 0.0
      %v234 = vand.u32 %v193, 2147483648
      %v235 = vsel %vm233, %v234, %v232
      %v236 = vrsqrt.pop %v196
      %v237 = vmul.f32 %v236, %v196
      %v238 = vmul.f32 %v237, %v236
      %v239 = vmul.f32 0.5, %v238
      %v240 = vsub.f32 1.5, %v239
      %v241 = vmul.f32 %v236, %v240
      %v242 = vmul.f32 %v196, %v241
      %vm243 = vcmp.eq.f32.partialorder %v196, inf
      %v244 = vsel %vm243, %v196, %v242
      %vm245 = vcmp.eq.f32.partialorder %v196, 0.0
      %v246 = vand.u32 %v196, 2147483648
      %v247 = vsel %vm245, %v246, %v244
      %v248 = vrsqrt.pop %v199
      %v249 = vmul.f32 %v248, %v199
      %v250 = vmul.f32 %v249, %v248
      %v251 = vmul.f32 0.5, %v250
      %v252 = vsub.f32 1.5, %v251
      %v253 = vmul.f32 %v248, %v252
      %v254 = vmul.f32 %v199, %v253
      %vm255 = vcmp.eq.f32.partialorder %v199, inf
      %v256 = vsel %vm255, %v199, %v254
      %vm257 = vcmp.eq.f32.partialorder %v199, 0.0
      %v258 = vand.u32 %v199, 2147483648
      %v259 = vsel %vm257, %v258, %v256
      %v260 = vrsqrt.pop %v202
      %v261 = vmul.f32 %v260, %v202
      %v262 = vmul.f32 %v261, %v260
      %v263 = vmul.f32 0.5, %v262
      %v264 = vsub.f32 1.5, %v263
      %v265 = vmul.f32 %v260, %v264
      %v266 = vmul.f32 %v202, %v265
      %vm267 = vcmp.eq.f32.partialorder %v202, inf
      %v268 = vsel %vm267, %v202, %v266
      %vm269 = vcmp.eq.f32.partialorder %v202, 0.0
      %v270 = vand.u32 %v202, 2147483648
      %v271 = vsel %vm269, %v270, %v268
      %v272 = vrsqrt.pop %v205
      %v273 = vmul.f32 %v272, %v205
      %v274 = vmul.f32 %v273, %v272
      %v275 = vmul.f32 0.5, %v274
      %v276 = vsub.f32 1.5, %v275
      %v277 = vmul.f32 %v272, %v276
      %v278 = vmul.f32 %v205, %v277
      %vm279 = vcmp.eq.f32.partialorder %v205, inf
      %v280 = vsel %vm279, %v205, %v278
      %vm281 = vcmp.eq.f32.partialorder %v205, 0.0
      %v282 = vand.u32 %v205, 2147483648
      %v283 = vsel %vm281, %v282, %v280
      %v284 = vrsqrt.pop %v208
      %v285 = vmul.f32 %v284, %v208
      %v286 = vmul.f32 %v285, %v284
      %v287 = vmul.f32 0.5, %v286
      %v288 = vsub.f32 1.5, %v287
      %v289 = vmul.f32 %v284, %v288
      %v290 = vmul.f32 %v208, %v289
      %vm291 = vcmp.eq.f32.partialorder %v208, inf
      %v292 = vsel %vm291, %v208, %v290
      %vm293 = vcmp.eq.f32.partialorder %v208, 0.0
      %v294 = vand.u32 %v208, 2147483648
      %v295 = vsel %vm293, %v294, %v292
      %v296 = vrsqrt.pop %v211
      %v297 = vmul.f32 %v296, %v211
      %v298 = vmul.f32 %v297, %v296
      %v299 = vmul.f32 0.5, %v298
      %v300 = vsub.f32 1.5, %v299
      %v301 = vmul.f32 %v296, %v300
      %v302 = vmul.f32 %v211, %v301
      %vm303 = vcmp.eq.f32.partialorder %v211, inf
      %v304 = vsel %vm303, %v211, %v302
      %vm305 = vcmp.eq.f32.partialorder %v211, 0.0
      %v306 = vand.u32 %v211, 2147483648
      %v307 = vsel %vm305, %v306, %v304
      %v308 = vadd.f32 %v223, 1e-08
      %v309 = vadd.f32 %v235, 1e-08
      %v310 = vadd.f32 %v247, 1e-08
      %v311 = vadd.f32 %v259, 1e-08
      %v312 = vadd.f32 %v271, 1e-08
      %v313 = vadd.f32 %v283, 1e-08
      %v314 = vadd.f32 %v295, 1e-08
      %v315 = vadd.f32 %v307, 1e-08
      %v316 = vrcp.pop %v308
      %v317 = vmul.f32 %v308, %v316
      %v318 = vsub.f32 1.0, %v317
      %v319 = vmul.f32 %v316, %v318
      %v320 = vadd.f32 %v316, %v319
      %vm321 = vweird.f32 %v308
      %vm322 = vweird.f32 %v316
      %vm323 = vmor %vm321, %vm322
      %v324 = vsel %vm323, %v316, %v320
      %v325 = vand.u32 2147483647, %v308
      %vm326 = vcmp.eq.f32.partialorder %v325, 8.507059e+37
      %v327 = vand.u32 %v308, 2147483648
      %v328 = vor.u32 1.1754944e-38, %v327
      %v329 = vsel %vm326, %v328, %v324
      %v330 = vmul.f32 1.0, %v329
      %v331 = vrcp.pop %v309
      %v332 = vmul.f32 %v309, %v331
      %v333 = vsub.f32 1.0, %v332
      %v334 = vmul.f32 %v331, %v333
      %v335 = vadd.f32 %v331, %v334
      %vm336 = vweird.f32 %v309
      %vm337 = vweird.f32 %v331
      %vm338 = vmor %vm336, %vm337
      %v339 = vsel %vm338, %v331, %v335
      %v340 = vand.u32 2147483647, %v309
      %vm341 = vcmp.eq.f32.partialorder %v340, 8.507059e+37
      %v342 = vand.u32 %v309, 2147483648
      %v343 = vor.u32 1.1754944e-38, %v342
      %v344 = vsel %vm341, %v343, %v339
      %v345 = vmul.f32 1.0, %v344
      %v346 = vrcp.pop %v310
      %v347 = vmul.f32 %v310, %v346
      %v348 = vsub.f32 1.0, %v347
      %v349 = vmul.f32 %v346, %v348
      %v350 = vadd.f32 %v346, %v349
      %vm351 = vweird.f32 %v310
      %vm352 = vweird.f32 %v346
      %vm353 = vmor %vm351, %vm352
      %v354 = vsel %vm353, %v346, %v350
      %v355 = vand.u32 2147483647, %v310
      %vm356 = vcmp.eq.f32.partialorder %v355, 8.507059e+37
      %v357 = vand.u32 %v310, 2147483648
      %v358 = vor.u32 1.1754944e-38, %v357
      %v359 = vsel %vm356, %v358, %v354
      %v360 = vmul.f32 1.0, %v359
      %v361 = vrcp.pop %v311
      %v362 = vmul.f32 %v311, %v361
      %v363 = vsub.f32 1.0, %v362
      %v364 = vmul.f32 %v361, %v363
      %v365 = vadd.f32 %v361, %v364
      %vm366 = vweird.f32 %v311
      %vm367 = vweird.f32 %v361
      %vm368 = vmor %vm366, %vm367
      %v369 = vsel %vm368, %v361, %v365
      %v370 = vand.u32 2147483647, %v311
      %vm371 = vcmp.eq.f32.partialorder %v370, 8.507059e+37
      %v372 = vand.u32 %v311, 2147483648
      %v373 = vor.u32 1.1754944e-38, %v372
      %v374 = vsel %vm371, %v373, %v369
      %v375 = vmul.f32 1.0, %v374
      %v376 = vrcp.pop %v312
      %v377 = vmul.f32 %v312, %v376
      %v378 = vsub.f32 1.0, %v377
      %v379 = vmul.f32 %v376, %v378
      %v380 = vadd.f32 %v376, %v379
      %vm381 = vweird.f32 %v312
      %vm382 = vweird.f32 %v376
      %vm383 = vmor %vm381, %vm382
      %v384 = vsel %vm383, %v376, %v380
      %v385 = vand.u32 2147483647, %v312
      %vm386 = vcmp.eq.f32.partialorder %v385, 8.507059e+37
      %v387 = vand.u32 %v312, 2147483648
      %v388 = vor.u32 1.1754944e-38, %v387
      %v389 = vsel %vm386, %v388, %v384
      %v390 = vmul.f32 1.0, %v389
      %v391 = vrcp.pop %v313
      %v392 = vmul.f32 %v313, %v391
      %v393 = vsub.f32 1.0, %v392
      %v394 = vmul.f32 %v391, %v393
      %v395 = vadd.f32 %v391, %v394
      %vm396 = vweird.f32 %v313
      %vm397 = vweird.f32 %v391
      %vm398 = vmor %vm396, %vm397
      %v399 = vsel %vm398, %v391, %v395
      %v400 = vand.u32 2147483647, %v313
      %vm401 = vcmp.eq.f32.partialorder %v400, 8.507059e+37
      %v402 = vand.u32 %v313, 2147483648
      %v403 = vor.u32 1.1754944e-38, %v402
      %v404 = vsel %vm401, %v403, %v399
      %v405 = vmul.f32 1.0, %v404
      %v406 = vrcp.pop %v314
      %v407 = vmul.f32 %v314, %v406
      %v408 = vsub.f32 1.0, %v407
      %v409 = vmul.f32 %v406, %v408
      %v410 = vadd.f32 %v406, %v409
      %vm411 = vweird.f32 %v314
      %vm412 = vweird.f32 %v406
      %vm413 = vmor %vm411, %vm412
      %v414 = vsel %vm413, %v406, %v410
      %v415 = vand.u32 2147483647, %v314
      %vm416 = vcmp.eq.f32.partialorder %v415, 8.507059e+37
      %v417 = vand.u32 %v314, 2147483648
      %v418 = vor.u32 1.1754944e-38, %v417
      %v419 = vsel %vm416, %v418, %v414
      %v420 = vmul.f32 1.0, %v419
      %v421 = vrcp.pop %v315
      %v422 = vmul.f32 %v315, %v421
      %v423 = vsub.f32 1.0, %v422
      %v424 = vmul.f32 %v421, %v423
      %v425 = vadd.f32 %v421, %v424
      %vm426 = vweird.f32 %v315
      %vm427 = vweird.f32 %v421
      %vm428 = vmor %vm426, %vm427
      %v429 = vsel %vm428, %v421, %v425
      %v430 = vand.u32 2147483647, %v315
      %vm431 = vcmp.eq.f32.partialorder %v430, 8.507059e+37
      %v432 = vand.u32 %v315, 2147483648
      %v433 = vor.u32 1.1754944e-38, %v432
      %v434 = vsel %vm431, %v433, %v429
      %v435 = vmul.f32 1.0, %v434
      %v436 = vmul.f32 %v171, %v330
      %v437 = vmul.f32 %v172, %v345
      %v438 = vmul.f32 %v173, %v360
      %v439 = vmul.f32 %v174, %v375
      %v440 = vmul.f32 %v175, %v390
      %v441 = vmul.f32 %v176, %v405
      %v442 = vmul.f32 %v177, %v420
      %v443 = vmul.f32 %v178, %v435
      %s444 = scalar_lea.vmem %s165, 64
      %v445 = vld [vmem:[%s444] sm:$0xff]
      %v446 = vld [vmem:[%s444 + $0x8] sm:$0xff]
      %v447 = vld [vmem:[%s444 + $0x10] sm:$0xff]
      %v448 = vld [vmem:[%s444 + $0x18] sm:$0xff]
      %v449 = vld [vmem:[%s444 + $0x20] sm:$0xff]
      %v450 = vld [vmem:[%s444 + $0x28] sm:$0xff]
      %v451 = vld [vmem:[%s444 + $0x30] sm:$0xff]
      %v452 = vld [vmem:[%s444 + $0x38] sm:$0xff]
      %v453 = vmul.f32 %v445, %v445
      %v454 = vmul.f32 %v446, %v446
      %v455 = vmul.f32 %v447, %v447
      %v456 = vmul.f32 %v448, %v448
      %v457 = vmul.f32 %v449, %v449
      %v458 = vmul.f32 %v450, %v450
      %v459 = vmul.f32 %v451, %v451
      %v460 = vmul.f32 %v452, %v452
      %v461 = vsel %vm187, %v453, 0.0
      %462 = vadd.xlane.f32.xlu0 %v461
      %v463 = vpop.xlane.xlu0 %462
      %v464 = vsel %vm187, %v454, 0.0
      %465 = vadd.xlane.f32.xlu0 %v464
      %v466 = vpop.xlane.xlu0 %465
      %v467 = vsel %vm187, %v455, 0.0
      %468 = vadd.xlane.f32.xlu0 %v467
      %v469 = vpop.xlane.xlu0 %468
      %v470 = vsel %vm187, %v456, 0.0
      %471 = vadd.xlane.f32.xlu0 %v470
      %v472 = vpop.xlane.xlu0 %471
      %v473 = vsel %vm187, %v457, 0.0
      %474 = vadd.xlane.f32.xlu0 %v473
      %v475 = vpop.xlane.xlu0 %474
      %v476 = vsel %vm187, %v458, 0.0
      %477 = vadd.xlane.f32.xlu0 %v476
      %v478 = vpop.xlane.xlu0 %477
      %v479 = vsel %vm187, %v459, 0.0
      %480 = vadd.xlane.f32.xlu0 %v479
      %v481 = vpop.xlane.xlu0 %480
      %v482 = vsel %vm187, %v460, 0.0
      %483 = vadd.xlane.f32.xlu0 %v482
      %v484 = vpop.xlane.xlu0 %483
      %v485 = vrsqrt.pop %v463
      %v486 = vmul.f32 %v485, %v463
      %v487 = vmul.f32 %v486, %v485
      %v488 = vmul.f32 0.5, %v487
      %v489 = vsub.f32 1.5, %v488
      %v490 = vmul.f32 %v485, %v489
      %v491 = vmul.f32 %v463, %v490
      %vm492 = vcmp.eq.f32.partialorder %v463, inf
      %v493 = vsel %vm492, %v463, %v491
      %vm494 = vcmp.eq.f32.partialorder %v463, 0.0
      %v495 = vand.u32 %v463, 2147483648
      %v496 = vsel %vm494, %v495, %v493
      %v497 = vrsqrt.pop %v466
      %v498 = vmul.f32 %v497, %v466
      %v499 = vmul.f32 %v498, %v497
      %v500 = vmul.f32 0.5, %v499
      %v501 = vsub.f32 1.5, %v500
      %v502 = vmul.f32 %v497, %v501
      %v503 = vmul.f32 %v466, %v502
      %vm504 = vcmp.eq.f32.partialorder %v466, inf
      %v505 = vsel %vm504, %v466, %v503
      %vm506 = vcmp.eq.f32.partialorder %v466, 0.0
      %v507 = vand.u32 %v466, 2147483648
      %v508 = vsel %vm506, %v507, %v505
      %v509 = vrsqrt.pop %v469
      %v510 = vmul.f32 %v509, %v469
      %v511 = vmul.f32 %v510, %v509
      %v512 = vmul.f32 0.5, %v511
      %v513 = vsub.f32 1.5, %v512
      %v514 = vmul.f32 %v509, %v513
      %v515 = vmul.f32 %v469, %v514
      %vm516 = vcmp.eq.f32.partialorder %v469, inf
      %v517 = vsel %vm516, %v469, %v515
      %vm518 = vcmp.eq.f32.partialorder %v469, 0.0
      %v519 = vand.u32 %v469, 2147483648
      %v520 = vsel %vm518, %v519, %v517
      %v521 = vrsqrt.pop %v472
      %v522 = vmul.f32 %v521, %v472
      %v523 = vmul.f32 %v522, %v521
      %v524 = vmul.f32 0.5, %v523
      %v525 = vsub.f32 1.5, %v524
      %v526 = vmul.f32 %v521, %v525
      %v527 = vmul.f32 %v472, %v526
      %vm528 = vcmp.eq.f32.partialorder %v472, inf
      %v529 = vsel %vm528, %v472, %v527
      %vm530 = vcmp.eq.f32.partialorder %v472, 0.0
      %v531 = vand.u32 %v472, 2147483648
      %v532 = vsel %vm530, %v531, %v529
      %v533 = vrsqrt.pop %v475
      %v534 = vmul.f32 %v533, %v475
      %v535 = vmul.f32 %v534, %v533
      %v536 = vmul.f32 0.5, %v535
      %v537 = vsub.f32 1.5, %v536
      %v538 = vmul.f32 %v533, %v537
      %v539 = vmul.f32 %v475, %v538
      %vm540 = vcmp.eq.f32.partialorder %v475, inf
      %v541 = vsel %vm540, %v475, %v539
      %vm542 = vcmp.eq.f32.partialorder %v475, 0.0
      %v543 = vand.u32 %v475, 2147483648
      %v544 = vsel %vm542, %v543, %v541
      %v545 = vrsqrt.pop %v478
      %v546 = vmul.f32 %v545, %v478
      %v547 = vmul.f32 %v546, %v545
      %v548 = vmul.f32 0.5, %v547
      %v549 = vsub.f32 1.5, %v548
      %v550 = vmul.f32 %v545, %v549
      %v551 = vmul.f32 %v478, %v550
      %vm552 = vcmp.eq.f32.partialorder %v478, inf
      %v553 = vsel %vm552, %v478, %v551
      %vm554 = vcmp.eq.f32.partialorder %v478, 0.0
      %v555 = vand.u32 %v478, 2147483648
      %v556 = vsel %vm554, %v555, %v553
      %v557 = vrsqrt.pop %v481
      %v558 = vmul.f32 %v557, %v481
      %v559 = vmul.f32 %v558, %v557
      %v560 = vmul.f32 0.5, %v559
      %v561 = vsub.f32 1.5, %v560
      %v562 = vmul.f32 %v557, %v561
      %v563 = vmul.f32 %v481, %v562
      %vm564 = vcmp.eq.f32.partialorder %v481, inf
      %v565 = vsel %vm564, %v481, %v563
      %vm566 = vcmp.eq.f32.partialorder %v481, 0.0
      %v567 = vand.u32 %v481, 2147483648
      %v568 = vsel %vm566, %v567, %v565
      %v569 = vrsqrt.pop %v484
      %v570 = vmul.f32 %v569, %v484
      %v571 = vmul.f32 %v570, %v569
      %v572 = vmul.f32 0.5, %v571
      %v573 = vsub.f32 1.5, %v572
      %v574 = vmul.f32 %v569, %v573
      %v575 = vmul.f32 %v484, %v574
      %vm576 = vcmp.eq.f32.partialorder %v484, inf
      %v577 = vsel %vm576, %v484, %v575
      %vm578 = vcmp.eq.f32.partialorder %v484, 0.0
      %v579 = vand.u32 %v484, 2147483648
      %v580 = vsel %vm578, %v579, %v577
      %v581 = vadd.f32 %v496, 1e-08
      %v582 = vadd.f32 %v508, 1e-08
      %v583 = vadd.f32 %v520, 1e-08
      %v584 = vadd.f32 %v532, 1e-08
      %v585 = vadd.f32 %v544, 1e-08
      %v586 = vadd.f32 %v556, 1e-08
      %v587 = vadd.f32 %v568, 1e-08
      %v588 = vadd.f32 %v580, 1e-08
      %v589 = vrcp.pop %v581
      %v590 = vmul.f32 %v581, %v589
      %v591 = vsub.f32 1.0, %v590
      %v592 = vmul.f32 %v589, %v591
      %v593 = vadd.f32 %v589, %v592
      %vm594 = vweird.f32 %v581
      %vm595 = vweird.f32 %v589
      %vm596 = vmor %vm594, %vm595
      %v597 = vsel %vm596, %v589, %v593
      %v598 = vand.u32 2147483647, %v581
      %vm599 = vcmp.eq.f32.partialorder %v598, 8.507059e+37
      %v600 = vand.u32 %v581, 2147483648
      %v601 = vor.u32 1.1754944e-38, %v600
      %v602 = vsel %vm599, %v601, %v597
      %v603 = vmul.f32 1.0, %v602
      %v604 = vrcp.pop %v582
      %v605 = vmul.f32 %v582, %v604
      %v606 = vsub.f32 1.0, %v605
      %v607 = vmul.f32 %v604, %v606
      %v608 = vadd.f32 %v604, %v607
      %vm609 = vweird.f32 %v582
      %vm610 = vweird.f32 %v604
      %vm611 = vmor %vm609, %vm610
      %v612 = vsel %vm611, %v604, %v608
      %v613 = vand.u32 2147483647, %v582
      %vm614 = vcmp.eq.f32.partialorder %v613, 8.507059e+37
      %v615 = vand.u32 %v582, 2147483648
      %v616 = vor.u32 1.1754944e-38, %v615
      %v617 = vsel %vm614, %v616, %v612
      %v618 = vmul.f32 1.0, %v617
      %v619 = vrcp.pop %v583
      %v620 = vmul.f32 %v583, %v619
      %v621 = vsub.f32 1.0, %v620
      %v622 = vmul.f32 %v619, %v621
      %v623 = vadd.f32 %v619, %v622
      %vm624 = vweird.f32 %v583
      %vm625 = vweird.f32 %v619
      %vm626 = vmor %vm624, %vm625
      %v627 = vsel %vm626, %v619, %v623
      %v628 = vand.u32 2147483647, %v583
      %vm629 = vcmp.eq.f32.partialorder %v628, 8.507059e+37
      %v630 = vand.u32 %v583, 2147483648
      %v631 = vor.u32 1.1754944e-38, %v630
      %v632 = vsel %vm629, %v631, %v627
      %v633 = vmul.f32 1.0, %v632
      %v634 = vrcp.pop %v584
      %v635 = vmul.f32 %v584, %v634
      %v636 = vsub.f32 1.0, %v635
      %v637 = vmul.f32 %v634, %v636
      %v638 = vadd.f32 %v634, %v637
      %vm639 = vweird.f32 %v584
      %vm640 = vweird.f32 %v634
      %vm641 = vmor %vm639, %vm640
      %v642 = vsel %vm641, %v634, %v638
      %v643 = vand.u32 2147483647, %v584
      %vm644 = vcmp.eq.f32.partialorder %v643, 8.507059e+37
      %v645 = vand.u32 %v584, 2147483648
      %v646 = vor.u32 1.1754944e-38, %v645
      %v647 = vsel %vm644, %v646, %v642
      %v648 = vmul.f32 1.0, %v647
      %v649 = vrcp.pop %v585
      %v650 = vmul.f32 %v585, %v649
      %v651 = vsub.f32 1.0, %v650
      %v652 = vmul.f32 %v649, %v651
      %v653 = vadd.f32 %v649, %v652
      %vm654 = vweird.f32 %v585
      %vm655 = vweird.f32 %v649
      %vm656 = vmor %vm654, %vm655
      %v657 = vsel %vm656, %v649, %v653
      %v658 = vand.u32 2147483647, %v585
      %vm659 = vcmp.eq.f32.partialorder %v658, 8.507059e+37
      %v660 = vand.u32 %v585, 2147483648
      %v661 = vor.u32 1.1754944e-38, %v660
      %v662 = vsel %vm659, %v661, %v657
      %v663 = vmul.f32 1.0, %v662
      %v664 = vrcp.pop %v586
      %v665 = vmul.f32 %v586, %v664
      %v666 = vsub.f32 1.0, %v665
      %v667 = vmul.f32 %v664, %v666
      %v668 = vadd.f32 %v664, %v667
      %vm669 = vweird.f32 %v586
      %vm670 = vweird.f32 %v664
      %vm671 = vmor %vm669, %vm670
      %v672 = vsel %vm671, %v664, %v668
      %v673 = vand.u32 2147483647, %v586
      %vm674 = vcmp.eq.f32.partialorder %v673, 8.507059e+37
      %v675 = vand.u32 %v586, 2147483648
      %v676 = vor.u32 1.1754944e-38, %v675
      %v677 = vsel %vm674, %v676, %v672
      %v678 = vmul.f32 1.0, %v677
      %v679 = vrcp.pop %v587
      %v680 = vmul.f32 %v587, %v679
      %v681 = vsub.f32 1.0, %v680
      %v682 = vmul.f32 %v679, %v681
      %v683 = vadd.f32 %v679, %v682
      %vm684 = vweird.f32 %v587
      %vm685 = vweird.f32 %v679
      %vm686 = vmor %vm684, %vm685
      %v687 = vsel %vm686, %v679, %v683
      %v688 = vand.u32 2147483647, %v587
      %vm689 = vcmp.eq.f32.partialorder %v688, 8.507059e+37
      %v690 = vand.u32 %v587, 2147483648
      %v691 = vor.u32 1.1754944e-38, %v690
      %v692 = vsel %vm689, %v691, %v687
      %v693 = vmul.f32 1.0, %v692
      %v694 = vrcp.pop %v588
      %v695 = vmul.f32 %v588, %v694
      %v696 = vsub.f32 1.0, %v695
      %v697 = vmul.f32 %v694, %v696
      %v698 = vadd.f32 %v694, %v697
      %vm699 = vweird.f32 %v588
      %vm700 = vweird.f32 %v694
      %vm701 = vmor %vm699, %vm700
      %v702 = vsel %vm701, %v694, %v698
      %v703 = vand.u32 2147483647, %v588
      %vm704 = vcmp.eq.f32.partialorder %v703, 8.507059e+37
      %v705 = vand.u32 %v588, 2147483648
      %v706 = vor.u32 1.1754944e-38, %v705
      %v707 = vsel %vm704, %v706, %v702
      %v708 = vmul.f32 1.0, %v707
      %v709 = vmul.f32 %v445, %v603
      %v710 = vmul.f32 %v446, %v618
      %v711 = vmul.f32 %v447, %v633
      %v712 = vmul.f32 %v448, %v648
      %v713 = vmul.f32 %v449, %v663
      %v714 = vmul.f32 %v450, %v678
      %v715 = vmul.f32 %v451, %v693
      %v716 = vmul.f32 %v452, %v708
      %s717 = scalar_lea.vmem %s165, 128
      %v718 = vld [vmem:[%s717] sm:$0xff]
      %v719 = vld [vmem:[%s717 + $0x8] sm:$0xff]
      %v720 = vld [vmem:[%s717 + $0x10] sm:$0xff]
      %v721 = vld [vmem:[%s717 + $0x18] sm:$0xff]
      %v722 = vld [vmem:[%s717 + $0x20] sm:$0xff]
      %v723 = vld [vmem:[%s717 + $0x28] sm:$0xff]
      %v724 = vld [vmem:[%s717 + $0x30] sm:$0xff]
      %v725 = vmul.f32 %v718, %v718
      %v726 = vmul.f32 %v719, %v719
      %v727 = vmul.f32 %v720, %v720
      %v728 = vmul.f32 %v721, %v721
      %v729 = vmul.f32 %v722, %v722
      %v730 = vmul.f32 %v723, %v723
      %v731 = vmul.f32 %v724, %v724
      %v732 = vsel %vm187, %v725, 0.0
      %733 = vadd.xlane.f32.xlu0 %v732
      %v734 = vpop.xlane.xlu0 %733
      %v735 = vsel %vm187, %v726, 0.0
      %736 = vadd.xlane.f32.xlu0 %v735
      %v737 = vpop.xlane.xlu0 %736
      %v738 = vsel %vm187, %v727, 0.0
      %739 = vadd.xlane.f32.xlu0 %v738
      %v740 = vpop.xlane.xlu0 %739
      %v741 = vsel %vm187, %v728, 0.0
      %742 = vadd.xlane.f32.xlu0 %v741
      %v743 = vpop.xlane.xlu0 %742
      %v744 = vsel %vm187, %v729, 0.0
      %745 = vadd.xlane.f32.xlu0 %v744
      %v746 = vpop.xlane.xlu0 %745
      %v747 = vsel %vm187, %v730, 0.0
      %748 = vadd.xlane.f32.xlu0 %v747
      %v749 = vpop.xlane.xlu0 %748
      %v750 = vsel %vm187, %v731, 0.0
      %751 = vadd.xlane.f32.xlu0 %v750
      %v752 = vpop.xlane.xlu0 %751
      %v753 = vrsqrt.pop %v734
      %v754 = vmul.f32 %v753, %v734
      %v755 = vmul.f32 %v754, %v753
      %v756 = vmul.f32 0.5, %v755
      %v757 = vsub.f32 1.5, %v756
      %v758 = vmul.f32 %v753, %v757
      %v759 = vmul.f32 %v734, %v758
      %vm760 = vcmp.eq.f32.partialorder %v734, inf
      %v761 = vsel %vm760, %v734, %v759
      %vm762 = vcmp.eq.f32.partialorder %v734, 0.0
      %v763 = vand.u32 %v734, 2147483648
      %v764 = vsel %vm762, %v763, %v761
      %v765 = vrsqrt.pop %v737
      %v766 = vmul.f32 %v765, %v737
      %v767 = vmul.f32 %v766, %v765
      %v768 = vmul.f32 0.5, %v767
      %v769 = vsub.f32 1.5, %v768
      %v770 = vmul.f32 %v765, %v769
      %v771 = vmul.f32 %v737, %v770
      %vm772 = vcmp.eq.f32.partialorder %v737, inf
      %v773 = vsel %vm772, %v737, %v771
      %vm774 = vcmp.eq.f32.partialorder %v737, 0.0
      %v775 = vand.u32 %v737, 2147483648
      %v776 = vsel %vm774, %v775, %v773
      %v777 = vrsqrt.pop %v740
      %v778 = vmul.f32 %v777, %v740
      %v779 = vmul.f32 %v778, %v777
      %v780 = vmul.f32 0.5, %v779
      %v781 = vsub.f32 1.5, %v780
      %v782 = vmul.f32 %v777, %v781
      %v783 = vmul.f32 %v740, %v782
      %vm784 = vcmp.eq.f32.partialorder %v740, inf
      %v785 = vsel %vm784, %v740, %v783
      %vm786 = vcmp.eq.f32.partialorder %v740, 0.0
      %v787 = vand.u32 %v740, 2147483648
      %v788 = vsel %vm786, %v787, %v785
      %v789 = vrsqrt.pop %v743
      %v790 = vmul.f32 %v789, %v743
      %v791 = vmul.f32 %v790, %v789
      %v792 = vmul.f32 0.5, %v791
      %v793 = vsub.f32 1.5, %v792
      %v794 = vmul.f32 %v789, %v793
      %v795 = vmul.f32 %v743, %v794
      %vm796 = vcmp.eq.f32.partialorder %v743, inf
      %v797 = vsel %vm796, %v743, %v795
      %vm798 = vcmp.eq.f32.partialorder %v743, 0.0
      %v799 = vand.u32 %v743, 2147483648
      %v800 = vsel %vm798, %v799, %v797
      %v801 = vrsqrt.pop %v746
      %v802 = vmul.f32 %v801, %v746
      %v803 = vmul.f32 %v802, %v801
      %v804 = vmul.f32 0.5, %v803
      %v805 = vsub.f32 1.5, %v804
      %v806 = vmul.f32 %v801, %v805
      %v807 = vmul.f32 %v746, %v806
      %vm808 = vcmp.eq.f32.partialorder %v746, inf
      %v809 = vsel %vm808, %v746, %v807
      %vm810 = vcmp.eq.f32.partialorder %v746, 0.0
      %v811 = vand.u32 %v746, 2147483648
      %v812 = vsel %vm810, %v811, %v809
      %v813 = vrsqrt.pop %v749
      %v814 = vmul.f32 %v813, %v749
      %v815 = vmul.f32 %v814, %v813
      %v816 = vmul.f32 0.5, %v815
      %v817 = vsub.f32 1.5, %v816
      %v818 = vmul.f32 %v813, %v817
      %v819 = vmul.f32 %v749, %v818
      %vm820 = vcmp.eq.f32.partialorder %v749, inf
      %v821 = vsel %vm820, %v749, %v819
      %vm822 = vcmp.eq.f32.partialorder %v749, 0.0
      %v823 = vand.u32 %v749, 2147483648
      %v824 = vsel %vm822, %v823, %v821
      %v825 = vrsqrt.pop %v752
      %v826 = vmul.f32 %v825, %v752
      %v827 = vmul.f32 %v826, %v825
      %v828 = vmul.f32 0.5, %v827
      %v829 = vsub.f32 1.5, %v828
      %v830 = vmul.f32 %v825, %v829
      %v831 = vmul.f32 %v752, %v830
      %vm832 = vcmp.eq.f32.partialorder %v752, inf
      %v833 = vsel %vm832, %v752, %v831
      %vm834 = vcmp.eq.f32.partialorder %v752, 0.0
      %v835 = vand.u32 %v752, 2147483648
      %v836 = vsel %vm834, %v835, %v833
      %v837 = vadd.f32 %v764, 1e-08
      %v838 = vadd.f32 %v776, 1e-08
      %v839 = vadd.f32 %v788, 1e-08
      %v840 = vadd.f32 %v800, 1e-08
      %v841 = vadd.f32 %v812, 1e-08
      %v842 = vadd.f32 %v824, 1e-08
      %v843 = vadd.f32 %v836, 1e-08
      %v844 = vrcp.pop %v837
      %v845 = vmul.f32 %v837, %v844
      %v846 = vsub.f32 1.0, %v845
      %v847 = vmul.f32 %v844, %v846
      %v848 = vadd.f32 %v844, %v847
      %vm849 = vweird.f32 %v837
      %vm850 = vweird.f32 %v844
      %vm851 = vmor %vm849, %vm850
      %v852 = vsel %vm851, %v844, %v848
      %v853 = vand.u32 2147483647, %v837
      %vm854 = vcmp.eq.f32.partialorder %v853, 8.507059e+37
      %v855 = vand.u32 %v837, 2147483648
      %v856 = vor.u32 1.1754944e-38, %v855
      %v857 = vsel %vm854, %v856, %v852
      %v858 = vmul.f32 1.0, %v857
      %v859 = vrcp.pop %v838
      %v860 = vmul.f32 %v838, %v859
      %v861 = vsub.f32 1.0, %v860
      %v862 = vmul.f32 %v859, %v861
      %v863 = vadd.f32 %v859, %v862
      %vm864 = vweird.f32 %v838
      %vm865 = vweird.f32 %v859
      %vm866 = vmor %vm864, %vm865
      %v867 = vsel %vm866, %v859, %v863
      %v868 = vand.u32 2147483647, %v838
      %vm869 = vcmp.eq.f32.partialorder %v868, 8.507059e+37
      %v870 = vand.u32 %v838, 2147483648
      %v871 = vor.u32 1.1754944e-38, %v870
      %v872 = vsel %vm869, %v871, %v867
      %v873 = vmul.f32 1.0, %v872
      %v874 = vrcp.pop %v839
      %v875 = vmul.f32 %v839, %v874
      %v876 = vsub.f32 1.0, %v875
      %v877 = vmul.f32 %v874, %v876
      %v878 = vadd.f32 %v874, %v877
      %vm879 = vweird.f32 %v839
      %vm880 = vweird.f32 %v874
      %vm881 = vmor %vm879, %vm880
      %v882 = vsel %vm881, %v874, %v878
      %v883 = vand.u32 2147483647, %v839
      %vm884 = vcmp.eq.f32.partialorder %v883, 8.507059e+37
      %v885 = vand.u32 %v839, 2147483648
      %v886 = vor.u32 1.1754944e-38, %v885
      %v887 = vsel %vm884, %v886, %v882
      %v888 = vmul.f32 1.0, %v887
      %v889 = vrcp.pop %v840
      %v890 = vmul.f32 %v840, %v889
      %v891 = vsub.f32 1.0, %v890
      %v892 = vmul.f32 %v889, %v891
      %v893 = vadd.f32 %v889, %v892
      %vm894 = vweird.f32 %v840
      %vm895 = vweird.f32 %v889
      %vm896 = vmor %vm894, %vm895
      %v897 = vsel %vm896, %v889, %v893
      %v898 = vand.u32 2147483647, %v840
      %vm899 = vcmp.eq.f32.partialorder %v898, 8.507059e+37
      %v900 = vand.u32 %v840, 2147483648
      %v901 = vor.u32 1.1754944e-38, %v900
      %v902 = vsel %vm899, %v901, %v897
      %v903 = vmul.f32 1.0, %v902
      %v904 = vrcp.pop %v841
      %v905 = vmul.f32 %v841, %v904
      %v906 = vsub.f32 1.0, %v905
      %v907 = vmul.f32 %v904, %v906
      %v908 = vadd.f32 %v904, %v907
      %vm909 = vweird.f32 %v841
      %vm910 = vweird.f32 %v904
      %vm911 = vmor %vm909, %vm910
      %v912 = vsel %vm911, %v904, %v908
      %v913 = vand.u32 2147483647, %v841
      %vm914 = vcmp.eq.f32.partialorder %v913, 8.507059e+37
      %v915 = vand.u32 %v841, 2147483648
      %v916 = vor.u32 1.1754944e-38, %v915
      %v917 = vsel %vm914, %v916, %v912
      %v918 = vmul.f32 1.0, %v917
      %v919 = vrcp.pop %v842
      %v920 = vmul.f32 %v842, %v919
      %v921 = vsub.f32 1.0, %v920
      %v922 = vmul.f32 %v919, %v921
      %v923 = vadd.f32 %v919, %v922
      %vm924 = vweird.f32 %v842
      %vm925 = vweird.f32 %v919
      %vm926 = vmor %vm924, %vm925
      %v927 = vsel %vm926, %v919, %v923
      %v928 = vand.u32 2147483647, %v842
      %vm929 = vcmp.eq.f32.partialorder %v928, 8.507059e+37
      %v930 = vand.u32 %v842, 2147483648
      %v931 = vor.u32 1.1754944e-38, %v930
      %v932 = vsel %vm929, %v931, %v927
      %v933 = vmul.f32 1.0, %v932
      %v934 = vrcp.pop %v843
      %v935 = vmul.f32 %v843, %v934
      %v936 = vsub.f32 1.0, %v935
      %v937 = vmul.f32 %v934, %v936
      %v938 = vadd.f32 %v934, %v937
      %vm939 = vweird.f32 %v843
      %vm940 = vweird.f32 %v934
      %vm941 = vmor %vm939, %vm940
      %v942 = vsel %vm941, %v934, %v938
      %v943 = vand.u32 2147483647, %v843
      %vm944 = vcmp.eq.f32.partialorder %v943, 8.507059e+37
      %v945 = vand.u32 %v843, 2147483648
      %v946 = vor.u32 1.1754944e-38, %v945
      %v947 = vsel %vm944, %v946, %v942
      %v948 = vmul.f32 1.0, %v947
      %v949 = vmul.f32 %v718, %v858
      %v950 = vmul.f32 %v719, %v873
      %v951 = vmul.f32 %v720, %v888
      %v952 = vmul.f32 %v721, %v903
      %v953 = vmul.f32 %v722, %v918
      %v954 = vmul.f32 %v723, %v933
      %v955 = vmul.f32 %v724, %v948
      %s956 = scalar_lea.vmem %s165, 192
      %v957 = vld [vmem:[%s956] sm:$0xff]
      %v958 = vld [vmem:[%s956 + $0x8] sm:$0xff]
      %v959 = vld [vmem:[%s956 + $0x10] sm:$0xff]
      %v960 = vld [vmem:[%s956 + $0x18] sm:$0xff]
      %v961 = vld [vmem:[%s956 + $0x20] sm:$0xff]
      %v962 = vld [vmem:[%s956 + $0x28] sm:$0xff]
      %v963 = vld [vmem:[%s956 + $0x30] sm:$0xff]
      %v964 = vmul.f32 %v957, %v957
      %v965 = vmul.f32 %v958, %v958
      %v966 = vmul.f32 %v959, %v959
      %v967 = vmul.f32 %v960, %v960
      %v968 = vmul.f32 %v961, %v961
      %v969 = vmul.f32 %v962, %v962
      %v970 = vmul.f32 %v963, %v963
      %v971 = vsel %vm187, %v964, 0.0
      %972 = vadd.xlane.f32.xlu0 %v971
      %v973 = vpop.xlane.xlu0 %972
      %v974 = vsel %vm187, %v965, 0.0
      %975 = vadd.xlane.f32.xlu0 %v974
      %v976 = vpop.xlane.xlu0 %975
      %v977 = vsel %vm187, %v966, 0.0
      %978 = vadd.xlane.f32.xlu0 %v977
      %v979 = vpop.xlane.xlu0 %978
      %v980 = vsel %vm187, %v967, 0.0
      %981 = vadd.xlane.f32.xlu0 %v980
      %v982 = vpop.xlane.xlu0 %981
      %v983 = vsel %vm187, %v968, 0.0
      %984 = vadd.xlane.f32.xlu0 %v983
      %v985 = vpop.xlane.xlu0 %984
      %v986 = vsel %vm187, %v969, 0.0
      %987 = vadd.xlane.f32.xlu0 %v986
      %v988 = vpop.xlane.xlu0 %987
      %v989 = vsel %vm187, %v970, 0.0
      %990 = vadd.xlane.f32.xlu0 %v989
      %v991 = vpop.xlane.xlu0 %990
      %v992 = vrsqrt.pop %v973
      %v993 = vmul.f32 %v992, %v973
      %v994 = vmul.f32 %v993, %v992
      %v995 = vmul.f32 0.5, %v994
      %v996 = vsub.f32 1.5, %v995
      %v997 = vmul.f32 %v992, %v996
      %v998 = vmul.f32 %v973, %v997
      %vm999 = vcmp.eq.f32.partialorder %v973, inf
      %v1000 = vsel %vm999, %v973, %v998
      %vm1001 = vcmp.eq.f32.partialorder %v973, 0.0
      %v1002 = vand.u32 %v973, 2147483648
      %v1003 = vsel %vm1001, %v1002, %v1000
      %v1004 = vrsqrt.pop %v976
      %v1005 = vmul.f32 %v1004, %v976
      %v1006 = vmul.f32 %v1005, %v1004
      %v1007 = vmul.f32 0.5, %v1006
      %v1008 = vsub.f32 1.5, %v1007
      %v1009 = vmul.f32 %v1004, %v1008
      %v1010 = vmul.f32 %v976, %v1009
      %vm1011 = vcmp.eq.f32.partialorder %v976, inf
      %v1012 = vsel %vm1011, %v976, %v1010
      %vm1013 = vcmp.eq.f32.partialorder %v976, 0.0
      %v1014 = vand.u32 %v976, 2147483648
      %v1015 = vsel %vm1013, %v1014, %v1012
      %v1016 = vrsqrt.pop %v979
      %v1017 = vmul.f32 %v1016, %v979
      %v1018 = vmul.f32 %v1017, %v1016
      %v1019 = vmul.f32 0.5, %v1018
      %v1020 = vsub.f32 1.5, %v1019
      %v1021 = vmul.f32 %v1016, %v1020
      %v1022 = vmul.f32 %v979, %v1021
      %vm1023 = vcmp.eq.f32.partialorder %v979, inf
      %v1024 = vsel %vm1023, %v979, %v1022
      %vm1025 = vcmp.eq.f32.partialorder %v979, 0.0
      %v1026 = vand.u32 %v979, 2147483648
      %v1027 = vsel %vm1025, %v1026, %v1024
      %v1028 = vrsqrt.pop %v982
      %v1029 = vmul.f32 %v1028, %v982
      %v1030 = vmul.f32 %v1029, %v1028
      %v1031 = vmul.f32 0.5, %v1030
      %v1032 = vsub.f32 1.5, %v1031
      %v1033 = vmul.f32 %v1028, %v1032
      %v1034 = vmul.f32 %v982, %v1033
      %vm1035 = vcmp.eq.f32.partialorder %v982, inf
      %v1036 = vsel %vm1035, %v982, %v1034
      %vm1037 = vcmp.eq.f32.partialorder %v982, 0.0
      %v1038 = vand.u32 %v982, 2147483648
      %v1039 = vsel %vm1037, %v1038, %v1036
      %v1040 = vrsqrt.pop %v985
      %v1041 = vmul.f32 %v1040, %v985
      %v1042 = vmul.f32 %v1041, %v1040
      %v1043 = vmul.f32 0.5, %v1042
      %v1044 = vsub.f32 1.5, %v1043
      %v1045 = vmul.f32 %v1040, %v1044
      %v1046 = vmul.f32 %v985, %v1045
      %vm1047 = vcmp.eq.f32.partialorder %v985, inf
      %v1048 = vsel %vm1047, %v985, %v1046
      %vm1049 = vcmp.eq.f32.partialorder %v985, 0.0
      %v1050 = vand.u32 %v985, 2147483648
      %v1051 = vsel %vm1049, %v1050, %v1048
      %v1052 = vrsqrt.pop %v988
      %v1053 = vmul.f32 %v1052, %v988
      %v1054 = vmul.f32 %v1053, %v1052
      %v1055 = vmul.f32 0.5, %v1054
      %v1056 = vsub.f32 1.5, %v1055
      %v1057 = vmul.f32 %v1052, %v1056
      %v1058 = vmul.f32 %v988, %v1057
      %vm1059 = vcmp.eq.f32.partialorder %v988, inf
      %v1060 = vsel %vm1059, %v988, %v1058
      %vm1061 = vcmp.eq.f32.partialorder %v988, 0.0
      %v1062 = vand.u32 %v988, 2147483648
      %v1063 = vsel %vm1061, %v1062, %v1060
      %v1064 = vrsqrt.pop %v991
      %v1065 = vmul.f32 %v1064, %v991
      %v1066 = vmul.f32 %v1065, %v1064
      %v1067 = vmul.f32 0.5, %v1066
      %v1068 = vsub.f32 1.5, %v1067
      %v1069 = vmul.f32 %v1064, %v1068
      %v1070 = vmul.f32 %v991, %v1069
      %vm1071 = vcmp.eq.f32.partialorder %v991, inf
      %v1072 = vsel %vm1071, %v991, %v1070
      %vm1073 = vcmp.eq.f32.partialorder %v991, 0.0
      %v1074 = vand.u32 %v991, 2147483648
      %v1075 = vsel %vm1073, %v1074, %v1072
      %v1076 = vadd.f32 %v1003, 1e-08
      %v1077 = vadd.f32 %v1015, 1e-08
      %v1078 = vadd.f32 %v1027, 1e-08
      %v1079 = vadd.f32 %v1039, 1e-08
      %v1080 = vadd.f32 %v1051, 1e-08
      %v1081 = vadd.f32 %v1063, 1e-08
      %v1082 = vadd.f32 %v1075, 1e-08
      %v1083 = vrcp.pop %v1076
      %v1084 = vmul.f32 %v1076, %v1083
      %v1085 = vsub.f32 1.0, %v1084
      %v1086 = vmul.f32 %v1083, %v1085
      %v1087 = vadd.f32 %v1083, %v1086
      %vm1088 = vweird.f32 %v1076
      %vm1089 = vweird.f32 %v1083
      %vm1090 = vmor %vm1088, %vm1089
      %v1091 = vsel %vm1090, %v1083, %v1087
      %v1092 = vand.u32 2147483647, %v1076
      %vm1093 = vcmp.eq.f32.partialorder %v1092, 8.507059e+37
      %v1094 = vand.u32 %v1076, 2147483648
      %v1095 = vor.u32 1.1754944e-38, %v1094
      %v1096 = vsel %vm1093, %v1095, %v1091
      %v1097 = vmul.f32 1.0, %v1096
      %v1098 = vrcp.pop %v1077
      %v1099 = vmul.f32 %v1077, %v1098
      %v1100 = vsub.f32 1.0, %v1099
      %v1101 = vmul.f32 %v1098, %v1100
      %v1102 = vadd.f32 %v1098, %v1101
      %vm1103 = vweird.f32 %v1077
      %vm1104 = vweird.f32 %v1098
      %vm1105 = vmor %vm1103, %vm1104
      %v1106 = vsel %vm1105, %v1098, %v1102
      %v1107 = vand.u32 2147483647, %v1077
      %vm1108 = vcmp.eq.f32.partialorder %v1107, 8.507059e+37
      %v1109 = vand.u32 %v1077, 2147483648
      %v1110 = vor.u32 1.1754944e-38, %v1109
      %v1111 = vsel %vm1108, %v1110, %v1106
      %v1112 = vmul.f32 1.0, %v1111
      %v1113 = vrcp.pop %v1078
      %v1114 = vmul.f32 %v1078, %v1113
      %v1115 = vsub.f32 1.0, %v1114
      %v1116 = vmul.f32 %v1113, %v1115
      %v1117 = vadd.f32 %v1113, %v1116
      %vm1118 = vweird.f32 %v1078
      %vm1119 = vweird.f32 %v1113
      %vm1120 = vmor %vm1118, %vm1119
      %v1121 = vsel %vm1120, %v1113, %v1117
      %v1122 = vand.u32 2147483647, %v1078
      %vm1123 = vcmp.eq.f32.partialorder %v1122, 8.507059e+37
      %v1124 = vand.u32 %v1078, 2147483648
      %v1125 = vor.u32 1.1754944e-38, %v1124
      %v1126 = vsel %vm1123, %v1125, %v1121
      %v1127 = vmul.f32 1.0, %v1126
      %v1128 = vrcp.pop %v1079
      %v1129 = vmul.f32 %v1079, %v1128
      %v1130 = vsub.f32 1.0, %v1129
      %v1131 = vmul.f32 %v1128, %v1130
      %v1132 = vadd.f32 %v1128, %v1131
      %vm1133 = vweird.f32 %v1079
      %vm1134 = vweird.f32 %v1128
      %vm1135 = vmor %vm1133, %vm1134
      %v1136 = vsel %vm1135, %v1128, %v1132
      %v1137 = vand.u32 2147483647, %v1079
      %vm1138 = vcmp.eq.f32.partialorder %v1137, 8.507059e+37
      %v1139 = vand.u32 %v1079, 2147483648
      %v1140 = vor.u32 1.1754944e-38, %v1139
      %v1141 = vsel %vm1138, %v1140, %v1136
      %v1142 = vmul.f32 1.0, %v1141
      %v1143 = vrcp.pop %v1080
      %v1144 = vmul.f32 %v1080, %v1143
      %v1145 = vsub.f32 1.0, %v1144
      %v1146 = vmul.f32 %v1143, %v1145
      %v1147 = vadd.f32 %v1143, %v1146
      %vm1148 = vweird.f32 %v1080
      %vm1149 = vweird.f32 %v1143
      %vm1150 = vmor %vm1148, %vm1149
      %v1151 = vsel %vm1150, %v1143, %v1147
      %v1152 = vand.u32 2147483647, %v1080
      %vm1153 = vcmp.eq.f32.partialorder %v1152, 8.507059e+37
      %v1154 = vand.u32 %v1080, 2147483648
      %v1155 = vor.u32 1.1754944e-38, %v1154
      %v1156 = vsel %vm1153, %v1155, %v1151
      %v1157 = vmul.f32 1.0, %v1156
      %v1158 = vrcp.pop %v1081
      %v1159 = vmul.f32 %v1081, %v1158
      %v1160 = vsub.f32 1.0, %v1159
      %v1161 = vmul.f32 %v1158, %v1160
      %v1162 = vadd.f32 %v1158, %v1161
      %vm1163 = vweird.f32 %v1081
      %vm1164 = vweird.f32 %v1158
      %vm1165 = vmor %vm1163, %vm1164
      %v1166 = vsel %vm1165, %v1158, %v1162
      %v1167 = vand.u32 2147483647, %v1081
      %vm1168 = vcmp.eq.f32.partialorder %v1167, 8.507059e+37
      %v1169 = vand.u32 %v1081, 2147483648
      %v1170 = vor.u32 1.1754944e-38, %v1169
      %v1171 = vsel %vm1168, %v1170, %v1166
      %v1172 = vmul.f32 1.0, %v1171
      %v1173 = vrcp.pop %v1082
      %v1174 = vmul.f32 %v1082, %v1173
      %v1175 = vsub.f32 1.0, %v1174
      %v1176 = vmul.f32 %v1173, %v1175
      %v1177 = vadd.f32 %v1173, %v1176
      %vm1178 = vweird.f32 %v1082
      %vm1179 = vweird.f32 %v1173
      %vm1180 = vmor %vm1178, %vm1179
      %v1181 = vsel %vm1180, %v1173, %v1177
      %v1182 = vand.u32 2147483647, %v1082
      %vm1183 = vcmp.eq.f32.partialorder %v1182, 8.507059e+37
      %v1184 = vand.u32 %v1082, 2147483648
      %v1185 = vor.u32 1.1754944e-38, %v1184
      %v1186 = vsel %vm1183, %v1185, %v1181
      %v1187 = vmul.f32 1.0, %v1186
      %v1188 = vmul.f32 %v957, %v1097
      %v1189 = vmul.f32 %v958, %v1112
      %v1190 = vmul.f32 %v959, %v1127
      %v1191 = vmul.f32 %v960, %v1142
      %v1192 = vmul.f32 %v961, %v1157
      %v1193 = vmul.f32 %v962, %v1172
      %v1194 = vmul.f32 %v963, %v1187
      %1202 = vrot.lane.b32.xlu0 %v709, 4
      %v1203 = vpop.permute.xlu0 %1202
      %1204 = vrot.lane.b32.xlu0 %v710, 4
      %v1205 = vpop.permute.xlu0 %1204
      %1206 = vrot.lane.b32.xlu0 %v711, 4
      %v1207 = vpop.permute.xlu0 %1206
      %1208 = vrot.lane.b32.xlu0 %v712, 4
      %v1209 = vpop.permute.xlu0 %1208
      %1210 = vrot.lane.b32.xlu0 %v713, 4
      %v1211 = vpop.permute.xlu0 %1210
      %1212 = vrot.lane.b32.xlu0 %v714, 4
      %v1213 = vpop.permute.xlu0 %1212
      %1214 = vrot.lane.b32.xlu0 %v715, 4
      %v1215 = vpop.permute.xlu0 %1214
      %v1230 = vrot.slane %v436, 1
      %v1231 = vrot.slane %v437, 1
      %v1232 = vrot.slane %v438, 1
      %v1233 = vrot.slane %v439, 1
      %v1234 = vrot.slane %v440, 1
      %v1235 = vrot.slane %v441, 1
      %v1236 = vrot.slane %v442, 1
      %1237 = vrot.lane.b32.xlu0 %v1230, 8
      %v1238 = vpop.permute.xlu0 %1237
      %1239 = vrot.lane.b32.xlu0 %v1231, 8
      %v1240 = vpop.permute.xlu0 %1239
      %1241 = vrot.lane.b32.xlu0 %v1232, 8
      %v1242 = vpop.permute.xlu0 %1241
      %1243 = vrot.lane.b32.xlu0 %v1233, 8
      %v1244 = vpop.permute.xlu0 %1243
      %1245 = vrot.lane.b32.xlu0 %v1234, 8
      %v1246 = vpop.permute.xlu0 %1245
      %1247 = vrot.lane.b32.xlu0 %v1235, 8
      %v1248 = vpop.permute.xlu0 %1247
      %1249 = vrot.lane.b32.xlu0 %v1236, 8
      %v1250 = vpop.permute.xlu0 %1249
      %1265 = vrot.lane.b32.xlu0 %v949, 12
      %v1266 = vpop.permute.xlu0 %1265
      %1267 = vrot.lane.b32.xlu0 %v950, 12
      %v1268 = vpop.permute.xlu0 %1267
      %1269 = vrot.lane.b32.xlu0 %v951, 12
      %v1270 = vpop.permute.xlu0 %1269
      %1271 = vrot.lane.b32.xlu0 %v952, 12
      %v1272 = vpop.permute.xlu0 %1271
      %1273 = vrot.lane.b32.xlu0 %v953, 12
      %v1274 = vpop.permute.xlu0 %1273
      %1275 = vrot.lane.b32.xlu0 %v954, 12
      %v1276 = vpop.permute.xlu0 %1275
      %1277 = vrot.lane.b32.xlu0 %v955, 12
      %v1278 = vpop.permute.xlu0 %1277
      %1293 = vrot.lane.b32.xlu0 %v1188, 16
      %v1294 = vpop.permute.xlu0 %1293
      %1295 = vrot.lane.b32.xlu0 %v1189, 16
      %v1296 = vpop.permute.xlu0 %1295
      %1297 = vrot.lane.b32.xlu0 %v1190, 16
      %v1298 = vpop.permute.xlu0 %1297
      %1299 = vrot.lane.b32.xlu0 %v1191, 16
      %v1300 = vpop.permute.xlu0 %1299
      %1301 = vrot.lane.b32.xlu0 %v1192, 16
      %v1302 = vpop.permute.xlu0 %1301
      %1303 = vrot.lane.b32.xlu0 %v1193, 16
      %v1304 = vpop.permute.xlu0 %1303
      %1305 = vrot.lane.b32.xlu0 %v1194, 16
      %v1306 = vpop.permute.xlu0 %1305
      %v1314 = vrot.slane %v949, 1
      %v1315 = vrot.slane %v950, 1
      %v1316 = vrot.slane %v951, 1
      %v1317 = vrot.slane %v952, 1
      %v1318 = vrot.slane %v953, 1
      %v1319 = vrot.slane %v954, 1
      %v1320 = vrot.slane %v955, 1
      %1321 = vrot.lane.b32.xlu0 %v1314, 20
      %v1322 = vpop.permute.xlu0 %1321
      %1323 = vrot.lane.b32.xlu0 %v1315, 20
      %v1324 = vpop.permute.xlu0 %1323
      %1325 = vrot.lane.b32.xlu0 %v1316, 20
      %v1326 = vpop.permute.xlu0 %1325
      %1327 = vrot.lane.b32.xlu0 %v1317, 20
      %v1328 = vpop.permute.xlu0 %1327
      %1329 = vrot.lane.b32.xlu0 %v1318, 20
      %v1330 = vpop.permute.xlu0 %1329
      %1331 = vrot.lane.b32.xlu0 %v1319, 20
      %v1332 = vpop.permute.xlu0 %1331
      %1333 = vrot.lane.b32.xlu0 %v1320, 20
      %v1334 = vpop.permute.xlu0 %1333
      %1343 = vrot.lane.b32.xlu0 %v437, 24
      %v1344 = vpop.permute.xlu0 %1343
      %1345 = vrot.lane.b32.xlu0 %v438, 24
      %v1346 = vpop.permute.xlu0 %1345
      %1347 = vrot.lane.b32.xlu0 %v439, 24
      %v1348 = vpop.permute.xlu0 %1347
      %1349 = vrot.lane.b32.xlu0 %v440, 24
      %v1350 = vpop.permute.xlu0 %1349
      %1351 = vrot.lane.b32.xlu0 %v441, 24
      %v1352 = vpop.permute.xlu0 %1351
      %1353 = vrot.lane.b32.xlu0 %v442, 24
      %v1354 = vpop.permute.xlu0 %1353
      %1355 = vrot.lane.b32.xlu0 %v443, 24
      %v1356 = vpop.permute.xlu0 %1355
      %1365 = vrot.lane.b32.xlu0 %v710, 28
      %v1366 = vpop.permute.xlu0 %1365
      %1367 = vrot.lane.b32.xlu0 %v711, 28
      %v1368 = vpop.permute.xlu0 %1367
      %1369 = vrot.lane.b32.xlu0 %v712, 28
      %v1370 = vpop.permute.xlu0 %1369
      %1371 = vrot.lane.b32.xlu0 %v713, 28
      %v1372 = vpop.permute.xlu0 %1371
      %1373 = vrot.lane.b32.xlu0 %v714, 28
      %v1374 = vpop.permute.xlu0 %1373
      %1375 = vrot.lane.b32.xlu0 %v715, 28
      %v1376 = vpop.permute.xlu0 %1375
      %1377 = vrot.lane.b32.xlu0 %v716, 28
      %v1378 = vpop.permute.xlu0 %1377
      %v1386 = vrot.slane %v443, 1
      %1387 = vrot.lane.b32.xlu0 %v1231, 32
      %v1388 = vpop.permute.xlu0 %1387
      %1389 = vrot.lane.b32.xlu0 %v1232, 32
      %v1390 = vpop.permute.xlu0 %1389
      %1391 = vrot.lane.b32.xlu0 %v1233, 32
      %v1392 = vpop.permute.xlu0 %1391
      %1393 = vrot.lane.b32.xlu0 %v1234, 32
      %v1394 = vpop.permute.xlu0 %1393
      %1395 = vrot.lane.b32.xlu0 %v1235, 32
      %v1396 = vpop.permute.xlu0 %1395
      %1397 = vrot.lane.b32.xlu0 %v1236, 32
      %v1398 = vpop.permute.xlu0 %1397
      %1399 = vrot.lane.b32.xlu0 %v1386, 32
      %v1400 = vpop.permute.xlu0 %1399
      %v1408 = vsel %vm187, %v436, %v1203
      %v1409 = vsel %vm187, %v437, %v1205
      %v1410 = vsel %vm187, %v438, %v1207
      %v1411 = vsel %vm187, %v439, %v1209
      %v1412 = vsel %vm187, %v440, %v1211
      %v1413 = vsel %vm187, %v441, %v1213
      %v1414 = vsel %vm187, %v442, %v1215
      %vm1415 = vcmask 64512
      %v1416 = vsel %vm1415, %v1408, %v1238
      %v1417 = vsel %vm1415, %v1409, %v1240
      %v1418 = vsel %vm1415, %v1410, %v1242
      %v1419 = vsel %vm1415, %v1411, %v1244
      %v1420 = vsel %vm1415, %v1412, %v1246
      %v1421 = vsel %vm1415, %v1413, %v1248
      %v1422 = vsel %vm1415, %v1414, %v1250
      %vm1423 = vcmask 97280
      %v1424 = vsel %vm1423, %v1416, %v1266
      %v1425 = vsel %vm1423, %v1417, %v1268
      %v1426 = vsel %vm1423, %v1418, %v1270
      %v1427 = vsel %vm1423, %v1419, %v1272
      %v1428 = vsel %vm1423, %v1420, %v1274
      %v1429 = vsel %vm1423, %v1421, %v1276
      %v1430 = vsel %vm1423, %v1422, %v1278
      %vm1431 = vcmask 130048
      %v1432 = vsel %vm1431, %v1424, %v1294
      %v1433 = vsel %vm1431, %v1425, %v1296
      %v1434 = vsel %vm1431, %v1426, %v1298
      %v1435 = vsel %vm1431, %v1427, %v1300
      %v1436 = vsel %vm1431, %v1428, %v1302
      %v1437 = vsel %vm1431, %v1429, %v1304
      %v1438 = vsel %vm1431, %v1430, %v1306
      %vm1439 = vcmask 162816
      %v1440 = vsel %vm1439, %v1432, %v1322
      %v1441 = vsel %vm1439, %v1433, %v1324
      %v1442 = vsel %vm1439, %v1434, %v1326
      %v1443 = vsel %vm1439, %v1435, %v1328
      %v1444 = vsel %vm1439, %v1436, %v1330
      %v1445 = vsel %vm1439, %v1437, %v1332
      %v1446 = vsel %vm1439, %v1438, %v1334
      %vm1447 = vcmask 195584
      %v1448 = vsel %vm1447, %v1440, %v1344
      %v1449 = vsel %vm1447, %v1441, %v1346
      %v1450 = vsel %vm1447, %v1442, %v1348
      %v1451 = vsel %vm1447, %v1443, %v1350
      %v1452 = vsel %vm1447, %v1444, %v1352
      %v1453 = vsel %vm1447, %v1445, %v1354
      %v1454 = vsel %vm1447, %v1446, %v1356
      %vm1455 = vcmask 228352
      %v1456 = vsel %vm1455, %v1448, %v1366
      %v1457 = vsel %vm1455, %v1449, %v1368
      %v1458 = vsel %vm1455, %v1450, %v1370
      %v1459 = vsel %vm1455, %v1451, %v1372
      %v1460 = vsel %vm1455, %v1452, %v1374
      %v1461 = vsel %vm1455, %v1453, %v1376
      %v1462 = vsel %vm1455, %v1454, %v1378
      %vm1463 = vcmask 261120
      %v1464 = vsel %vm1463, %v1456, %v1388
      %v1465 = vsel %vm1463, %v1457, %v1390
      %v1466 = vsel %vm1463, %v1458, %v1392
      %v1467 = vsel %vm1463, %v1459, %v1394
      %v1468 = vsel %vm1463, %v1460, %v1396
      %v1469 = vsel %vm1463, %v1461, %v1398
      %v1470 = vsel %vm1463, %v1462, %v1400
      %v1478 = vrot.slane %v1464, 1
      %v1479 = vrot.slane %v1464, 2
      %v1480 = vrot.slane %v1464, 3
      %v1481 = vrot.slane %v1464, 4
      %v1482 = vrot.slane %v1464, 5
      %v1483 = vrot.slane %v1464, 6
      %v1484 = vrot.slane %v1465, 1
      %v1485 = vrot.slane %v1465, 2
      %v1486 = vrot.slane %v1465, 3
      %v1487 = vrot.slane %v1465, 4
      %v1488 = vrot.slane %v1465, 5
      %v1489 = vrot.slane %v1465, 6
      %v1490 = vrot.slane %v1466, 1
      %v1491 = vrot.slane %v1466, 2
      %v1492 = vrot.slane %v1466, 3
      %v1493 = vrot.slane %v1466, 4
      %v1494 = vrot.slane %v1466, 5
      %v1495 = vrot.slane %v1466, 6
      %v1496 = vrot.slane %v1467, 1
      %v1497 = vrot.slane %v1467, 2
      %v1498 = vrot.slane %v1467, 3
      %v1499 = vrot.slane %v1467, 4
      %v1500 = vrot.slane %v1467, 5
      %v1501 = vrot.slane %v1467, 6
      %v1502 = vrot.slane %v1468, 1
      %v1503 = vrot.slane %v1468, 2
      %v1504 = vrot.slane %v1468, 3
      %v1505 = vrot.slane %v1468, 4
      %v1506 = vrot.slane %v1468, 5
      %v1507 = vrot.slane %v1468, 6
      %v1508 = vrot.slane %v1469, 1
      %v1509 = vrot.slane %v1469, 2
      %v1510 = vrot.slane %v1469, 3
      %v1511 = vrot.slane %v1469, 4
      %v1512 = vrot.slane %v1469, 5
      %v1513 = vrot.slane %v1469, 6
      %v1514 = vrot.slane %v1470, 1
      %v1515 = vrot.slane %v1470, 2
      %v1516 = vrot.slane %v1470, 3
      %v1517 = vrot.slane %v1470, 4
      %v1518 = vrot.slane %v1470, 5
      %v1519 = vrot.slane %v1470, 6
      %v1520 = vld [vmem:[%s1] sm:$0xff]
      %v1521 = vld [vmem:[%s1 + $0x8] sm:$0xff]
      %v1522 = vld [vmem:[%s1 + $0x10] sm:$0xff]
      %v1523 = vld [vmem:[%s1 + $0x18] sm:$0xff]
      %v1524 = vld [vmem:[%s1 + $0x20] sm:$0xf]
      %v1525 = vld [vmem:[%s2] sm:$0x1]
      %v1527 = vperm.slane %v1525, 0
      %1529 = vst [vmem:[#allocation1] ss:$9 sm:$0xff] %v1464
      %s1530 = scalar_lea.vmem [#allocation1], 1
      %1531 = vst [vmem:[%s1530] ss:$9 sm:$0xff] %v1478
      %s1532 = scalar_lea.vmem [#allocation1], 2
      %1533 = vst [vmem:[%s1532] ss:$9 sm:$0xff] %v1479
      %s1534 = scalar_lea.vmem [#allocation1], 3
      %1535 = vst [vmem:[%s1534] ss:$9 sm:$0xff] %v1480
      %s1536 = scalar_lea.vmem [#allocation1], 4
      %1537 = vst [vmem:[%s1536] ss:$9 sm:$0xff] %v1481
      %s1538 = scalar_lea.vmem [#allocation1], 5
      %1539 = vst [vmem:[%s1538] ss:$9 sm:$0xff] %v1482
      %s1540 = scalar_lea.vmem [#allocation1], 6
      %1541 = vst [vmem:[%s1540] ss:$9 sm:$0xff] %v1483
      %s1542 = scalar_lea.vmem [#allocation1], 7
      %1543 = vst [vmem:[%s1542] ss:$9 sm:$0xff] %v1465
      %v1544 = vld [vmem:[#allocation1] sm:$0xff]
      %1545 = vst [vmem:[#allocation1] ss:$9 sm:$0xff] %v1484
      %1546 = vst [vmem:[%s1530] ss:$9 sm:$0xff] %v1485
      %1547 = vst [vmem:[%s1532] ss:$9 sm:$0xff] %v1486
      %1548 = vst [vmem:[%s1534] ss:$9 sm:$0xff] %v1487
      %1549 = vst [vmem:[%s1536] ss:$9 sm:$0xff] %v1488
      %1550 = vst [vmem:[%s1538] ss:$9 sm:$0xff] %v1489
      %1551 = vst [vmem:[%s1540] ss:$9 sm:$0xff] %v1466
      %1552 = vst [vmem:[%s1542] ss:$9 sm:$0xff] %v1490
      %v1553 = vld [vmem:[#allocation1] sm:$0xff]
      %1554 = vst [vmem:[#allocation1] ss:$9 sm:$0xff] %v1491
      %1555 = vst [vmem:[%s1530] ss:$9 sm:$0xff] %v1492
      %1556 = vst [vmem:[%s1532] ss:$9 sm:$0xff] %v1493
      %1557 = vst [vmem:[%s1534] ss:$9 sm:$0xff] %v1494
      %1558 = vst [vmem:[%s1536] ss:$9 sm:$0xff] %v1495
      %1559 = vst [vmem:[%s1538] ss:$9 sm:$0xff] %v1467
      %1560 = vst [vmem:[%s1540] ss:$9 sm:$0xff] %v1496
      %1561 = vst [vmem:[%s1542] ss:$9 sm:$0xff] %v1497
      %v1562 = vld [vmem:[#allocation1] sm:$0xff]
      %1563 = vst [vmem:[#allocation1] ss:$9 sm:$0xff] %v1498
      %1564 = vst [vmem:[%s1530] ss:$9 sm:$0xff] %v1499
      %1565 = vst [vmem:[%s1532] ss:$9 sm:$0xff] %v1500
      %1566 = vst [vmem:[%s1534] ss:$9 sm:$0xff] %v1501
      %1567 = vst [vmem:[%s1536] ss:$9 sm:$0xff] %v1468
      %1568 = vst [vmem:[%s1538] ss:$9 sm:$0xff] %v1502
      %1569 = vst [vmem:[%s1540] ss:$9 sm:$0xff] %v1503
      %1570 = vst [vmem:[%s1542] ss:$9 sm:$0xff] %v1504
      %v1571 = vld [vmem:[#allocation1] sm:$0xff]
      %1572 = vst [vmem:[#allocation1] ss:$9 sm:$0xff] %v1505
      %1573 = vst [vmem:[%s1530] ss:$9 sm:$0xff] %v1506
      %1574 = vst [vmem:[%s1532] ss:$9 sm:$0xff] %v1507
      %1575 = vst [vmem:[%s1534] ss:$9 sm:$0xff] %v1469
      %1576 = vst [vmem:[%s1536] ss:$9 sm:$0xff] %v1508
      %1577 = vst [vmem:[%s1538] ss:$9 sm:$0xff] %v1509
      %1578 = vst [vmem:[%s1540] ss:$9 sm:$0xff] %v1510
      %1579 = vst [vmem:[%s1542] ss:$9 sm:$0xff] %v1511
      %v1580 = vld [vmem:[#allocation1] sm:$0xff]
      %1581 = vst [vmem:[#allocation1] ss:$9 sm:$0xff] %v1512
      %1582 = vst [vmem:[%s1530] ss:$9 sm:$0xff] %v1513
      %1583 = vst [vmem:[%s1532] ss:$9 sm:$0xff] %v1470
      %1584 = vst [vmem:[%s1534] ss:$9 sm:$0xff] %v1514
      %1585 = vst [vmem:[%s1536] ss:$9 sm:$0xff] %v1515
      %1586 = vst [vmem:[%s1538] ss:$9 sm:$0xff] %v1516
      %1587 = vst [vmem:[%s1540] ss:$9 sm:$0xff] %v1517
      %1588 = vst [vmem:[%s1542] ss:$9 sm:$0xff] %v1518
      %v1589 = vld [vmem:[#allocation1] sm:$0xff]
      %1590 = vst [vmem:[#allocation1] ss:$9 sm:$0xff] %v1519
      %v1591 = vld [vmem:[#allocation1] sm:$0xff]
      %vm1592 = vcmask 293888
      %v1593 = vsel %vm1592, %v1544, 0
      %v1595 = vsel %vm1592, %v1553, 0
      %v1597 = vsel %vm1592, %v1562, 0
      %v1599 = vsel %vm1592, %v1571, 0
      %v1601 = vsel %vm1592, %v1580, 0
      %v1603 = vsel %vm1592, %v1589, 0
      %v1605 = vsel %vm1592, %v1591, 0
      %vm1607 = vcmask 1043456
      %v1609 = vsel %vm1607, %v1524, 0
      %1611 = vmatpush.msra.mxu0 0.0
      %1612 = vmatpush.msra.mxu0 0.0
      %1613 = vmatpush.msra.mxu0 0.0
      %1614 = vmatpush.msra.mxu0 0.0
      %1615 = vmatpush.msra.mxu0 0.0
      %1616 = vmatpush.msra.mxu0 0.0
      %1617 = vmatpush.msra.mxu0 0.0
      %1618 = vmatpush.msra.mxu0 0.0
      %1619 = vmatpush.msra.mxu0 0.0
      %1620 = vmatpush.msra.mxu0 0.0
      %1621 = vmatpush.msra.mxu0 0.0
      %1622 = vmatpush.msra.mxu0 %v1609
      %1623 = vmatpush.msra.mxu0 %v1523
      %1624 = vmatpush.msra.mxu0 %v1522
      %1625 = vmatpush.msra.mxu0 %v1521
      %1626 = vmatpush.msra.mxu0 %v1520
      %1627 = vmatmul.f32.gmra.mxu0 %v1593
      %v1628 = vpop.f32.mrf.mxu0
      %v1629 = vadd.f32 %v1527, %v1628
      %1630 = vmatmul.f32.gmra.mxu0 %v1595
      %v1631 = vpop.f32.mrf.mxu0
      %v1632 = vadd.f32 %v1527, %v1631
      %1633 = vmatmul.f32.gmra.mxu0 %v1597
      %v1634 = vpop.f32.mrf.mxu0
      %v1635 = vadd.f32 %v1527, %v1634
      %1636 = vmatmul.f32.gmra.mxu0 %v1599
      %v1637 = vpop.f32.mrf.mxu0
      %v1638 = vadd.f32 %v1527, %v1637
      %1639 = vmatmul.f32.gmra.mxu0 %v1601
      %v1640 = vpop.f32.mrf.mxu0
      %v1641 = vadd.f32 %v1527, %v1640
      %1642 = vmatmul.f32.gmra.mxu0 %v1603
      %v1643 = vpop.f32.mrf.mxu0
      %v1644 = vadd.f32 %v1527, %v1643
      %1645 = vmatmul.f32.gmra.mxu0 %v1605
      %v1646 = vpop.f32.mrf.mxu0
      %v1647 = vadd.f32 %v1527, %v1646
      %1648 = vdwg.mxu0
      %v1649 = vmax.f32 %v1629, 0.0
      %v1650 = vmax.f32 %v1632, 0.0
      %v1651 = vmax.f32 %v1635, 0.0
      %v1652 = vmax.f32 %v1638, 0.0
      %v1653 = vmax.f32 %v1641, 0.0
      %v1654 = vmax.f32 %v1644, 0.0
      %v1655 = vmax.f32 %v1647, 0.0
      %v1663 = vrot.slane %v1649, 1
      %v1664 = vrot.slane %v1649, 2
      %v1665 = vrot.slane %v1649, 3
      %v1666 = vrot.slane %v1649, 4
      %v1667 = vrot.slane %v1649, 5
      %v1668 = vrot.slane %v1649, 6
      %v1669 = vrot.slane %v1649, 7
      %v1670 = vrot.slane %v1650, 1
      %v1671 = vrot.slane %v1650, 2
      %v1672 = vrot.slane %v1650, 3
      %v1673 = vrot.slane %v1650, 4
      %v1674 = vrot.slane %v1650, 5
      %v1675 = vrot.slane %v1650, 6
      %v1676 = vrot.slane %v1650, 7
      %v1677 = vrot.slane %v1651, 1
      %v1678 = vrot.slane %v1651, 2
      %v1679 = vrot.slane %v1651, 3
      %v1680 = vrot.slane %v1651, 4
      %v1681 = vrot.slane %v1651, 5
      %v1682 = vrot.slane %v1651, 6
      %v1683 = vrot.slane %v1651, 7
      %v1684 = vrot.slane %v1652, 1
      %v1685 = vrot.slane %v1652, 2
      %v1686 = vrot.slane %v1652, 3
      %v1687 = vrot.slane %v1652, 4
      %v1688 = vrot.slane %v1652, 5
      %v1689 = vrot.slane %v1652, 6
      %v1690 = vrot.slane %v1652, 7
      %v1691 = vrot.slane %v1653, 1
      %v1692 = vrot.slane %v1653, 2
      %v1693 = vrot.slane %v1653, 3
      %v1694 = vrot.slane %v1653, 4
      %v1695 = vrot.slane %v1653, 5
      %v1696 = vrot.slane %v1653, 6
      %v1697 = vrot.slane %v1653, 7
      %v1698 = vrot.slane %v1654, 1
      %v1699 = vrot.slane %v1654, 2
      %v1700 = vrot.slane %v1654, 3
      %v1701 = vrot.slane %v1654, 4
      %v1702 = vrot.slane %v1654, 5
      %v1703 = vrot.slane %v1654, 6
      %v1704 = vrot.slane %v1654, 7
      %1705 = vst [vmem:[#allocation1] ss:$9 sm:$0xff] %v1649
      %s1706 = scalar_lea.vmem [#allocation1], 1
      %1707 = vst [vmem:[%s1706] ss:$9 sm:$0xff] %v1663
      %s1708 = scalar_lea.vmem [#allocation1], 2
      %1709 = vst [vmem:[%s1708] ss:$9 sm:$0xff] %v1664
      %s1710 = scalar_lea.vmem [#allocation1], 3
      %1711 = vst [vmem:[%s1710] ss:$9 sm:$0xff] %v1665
      %s1712 = scalar_lea.vmem [#allocation1], 4
      %1713 = vst [vmem:[%s1712] ss:$9 sm:$0xff] %v1666
      %s1714 = scalar_lea.vmem [#allocation1], 5
      %1715 = vst [vmem:[%s1714] ss:$9 sm:$0xff] %v1667
      %s1716 = scalar_lea.vmem [#allocation1], 6
      %1717 = vst [vmem:[%s1716] ss:$9 sm:$0xff] %v1668
      %v1718 = vld [vmem:[#allocation1] sm:$0xff]
      %1719 = vst [vmem:[#allocation1] ss:$9 sm:$0xff] %v1669
      %1720 = vst [vmem:[%s1706] ss:$9 sm:$0xff] %v1650
      %1721 = vst [vmem:[%s1708] ss:$9 sm:$0xff] %v1670
      %1722 = vst [vmem:[%s1710] ss:$9 sm:$0xff] %v1671
      %1723 = vst [vmem:[%s1712] ss:$9 sm:$0xff] %v1672
      %1724 = vst [vmem:[%s1714] ss:$9 sm:$0xff] %v1673
      %1725 = vst [vmem:[%s1716] ss:$9 sm:$0xff] %v1674
      %v1726 = vld [vmem:[#allocation1] sm:$0xff]
      %1727 = vst [vmem:[#allocation1] ss:$9 sm:$0xff] %v1675
      %1728 = vst [vmem:[%s1706] ss:$9 sm:$0xff] %v1676
      %1729 = vst [vmem:[%s1708] ss:$9 sm:$0xff] %v1651
      %1730 = vst [vmem:[%s1710] ss:$9 sm:$0xff] %v1677
      %1731 = vst [vmem:[%s1712] ss:$9 sm:$0xff] %v1678
      %1732 = vst [vmem:[%s1714] ss:$9 sm:$0xff] %v1679
      %1733 = vst [vmem:[%s1716] ss:$9 sm:$0xff] %v1680
      %v1734 = vld [vmem:[#allocation1] sm:$0xff]
      %1735 = vst [vmem:[#allocation1] ss:$9 sm:$0xff] %v1681
      %1736 = vst [vmem:[%s1706] ss:$9 sm:$0xff] %v1682
      %1737 = vst [vmem:[%s1708] ss:$9 sm:$0xff] %v1683
      %1738 = vst [vmem:[%s1710] ss:$9 sm:$0xff] %v1652
      %1739 = vst [vmem:[%s1712] ss:$9 sm:$0xff] %v1684
      %1740 = vst [vmem:[%s1714] ss:$9 sm:$0xff] %v1685
      %1741 = vst [vmem:[%s1716] ss:$9 sm:$0xff] %v1686
      %v1742 = vld [vmem:[#allocation1] sm:$0xff]
      %1743 = vst [vmem:[#allocation1] ss:$9 sm:$0xff] %v1687
      %1744 = vst [vmem:[%s1706] ss:$9 sm:$0xff] %v1688
      %1745 = vst [vmem:[%s1708] ss:$9 sm:$0xff] %v1689
      %1746 = vst [vmem:[%s1710] ss:$9 sm:$0xff] %v1690
      %1747 = vst [vmem:[%s1712] ss:$9 sm:$0xff] %v1653
      %1748 = vst [vmem:[%s1714] ss:$9 sm:$0xff] %v1691
      %1749 = vst [vmem:[%s1716] ss:$9 sm:$0xff] %v1692
      %v1750 = vld [vmem:[#allocation1] sm:$0xff]
      %1751 = vst [vmem:[#allocation1] ss:$9 sm:$0xff] %v1693
      %1752 = vst [vmem:[%s1706] ss:$9 sm:$0xff] %v1694
      %1753 = vst [vmem:[%s1708] ss:$9 sm:$0xff] %v1695
      %1754 = vst [vmem:[%s1710] ss:$9 sm:$0xff] %v1696
      %1755 = vst [vmem:[%s1712] ss:$9 sm:$0xff] %v1697
      %1756 = vst [vmem:[%s1714] ss:$9 sm:$0xff] %v1654
      %1757 = vst [vmem:[%s1716] ss:$9 sm:$0xff] %v1698
      %v1758 = vld [vmem:[#allocation1] sm:$0xff]
      %1759 = vst [vmem:[#allocation1] ss:$9 sm:$0xff] %v1699
      %1760 = vst [vmem:[%s1706] ss:$9 sm:$0xff] %v1700
      %1761 = vst [vmem:[%s1708] ss:$9 sm:$0xff] %v1701
      %1762 = vst [vmem:[%s1710] ss:$9 sm:$0xff] %v1702
      %1763 = vst [vmem:[%s1712] ss:$9 sm:$0xff] %v1703
      %1764 = vst [vmem:[%s1714] ss:$9 sm:$0xff] %v1704
      %1765 = vst [vmem:[%s1716] ss:$9 sm:$0xff] %v1655
      %v1766 = vld [vmem:[#allocation1] sm:$0xff]
      %1774 = vst [vmem:[%s170] sm:$0x7f] %v1718
      %1775 = vst [vmem:[%s170 + $0x8] sm:$0x7f] %v1726
      %1776 = vst [vmem:[%s170 + $0x10] sm:$0x7f] %v1734
      %1777 = vst [vmem:[%s170 + $0x18] sm:$0x7f] %v1742
      %1778 = vst [vmem:[%s170 + $0x20] sm:$0x7f] %v1750
      %1779 = vst [vmem:[%s170 + $0x28] sm:$0x7f] %v1758
      %1780 = vst [vmem:[%s170 + $0x30] sm:$0x7f] %v1766
      %p1781 = scmp.lt.s32.totalorder %s14, 1
      %s1782 = scalar_select %p1781, %s14, 1
      %s1783 = smul.addr %s1782, 7
      %s1784 = smul.addr %s1783, 8
      %s1785 = scalar_lea.vmem %s3, %s1784
      // Predicated region
      $region33: #{tpu_custom_call.1} parent=31 // pred_check
        %p1786 = pneg %p100
      $region34: #{tpu_custom_call.1} parent=31 // pred_check_branch
        %1788 = sbr.rel (%p1786) target = $region36
      $region35: #{tpu_custom_call.1} parent=31 // pred_region
        _
      $region36: #{tpu_custom_call.1} parent=31 // pred_fallthru
        _
    $region32: #{tpu_custom_call.1} parent=5 // pred_fallthru
      _
    %p1789 = scmp.le.s32.totalorder 2, %s9
    // Predicated region
    $region37: #{tpu_custom_call.1} parent=5 // pred_check
      %p1790 = pneg %p1789
    $region38: #{tpu_custom_call.1} parent=5 // pred_check_branch
      %1792 = sbr.rel (%p1790) target = $region40
    $region39: #{tpu_custom_call.1} parent=5 // pred_region
      %s1793 = ssub.s32 %s9, 2
      // Predicated region
      $region41: #{tpu_custom_call.1} parent=39 // pred_check
        %p1794 = pneg %p106
      $region42: #{tpu_custom_call.1} parent=39 // pred_check_branch
        %1796 = sbr.rel (%p1794) target = $region44
      $region43: #{tpu_custom_call.1} parent=39 // pred_region
        %p1797 = scmp.lt.s32.totalorder %s15, 1
        %s1798 = scalar_select %p1797, %s15, 1
        %s1799 = smul.addr %s1798, 7
        %s1800 = smul.addr %s1799, 8
        %s1801 = scalar_lea.vmem %s3, %s1800
      $region44: #{tpu_custom_call.1} parent=39 // pred_fallthru
        _
    $region40: #{tpu_custom_call.1} parent=5 // pred_fallthru
      _
  $region6: #{tpu_custom_call.1} parent=0 // loop_footer
    %s13 = sadd.s32 1, %s9
  $region7: #{tpu_custom_call.1} parent=0 // loop_footer_branch
    %8 = sbr.rel target = $region3
  $region8: #{tpu_custom_call.1} parent=0 // loop_exit
    _

</llo_original>
